<compile_context>
chip_gen: v5e
topology: v5e:2x2
jax: 0.10.0
libtpu: 0.0.40
codegen_flags: <defaults>
</compile_context>

<pallas_src>
import functools

import jax
import jax.numpy as jnp
from jax.experimental import pallas as pl
from jax.experimental.pallas import tpu as pltpu

# True (logical) layer sizes of the MLP.
DIMS = [28 * 28, 256, 128, 64, 32, 16, 10]
IN_DIM = DIMS[0]
NUM_CLASSES = DIMS[-1]

# Lane-padded layer sizes actually used by the kernel (everything below 128 -> 128).
PAD_IN = [IN_DIM, 256, 128, 128, 128, 128]
PAD_OUT = [256, 128, 128, 128, 128, 128]
OUT_PAD = PAD_OUT[-1]


def _round_up(n, m):
    return ((n + m - 1) // m) * m


def _cdiv(a, b):
    return -(-a // b)


def _choose_batch_tile(B, batch_tile):
    """Pick a batch tile: multiple of 16 (bf16 sublane packing), grid kept >= 2 steps
    when B allows, preferring an even number of steps (v7x has 2 TensorCores)."""
    full = _round_up(B, 16)
    if full <= 32:
        return full                                   # tiny batch: single grid step
    # Cap so the grid has at least 2 steps.
    half = _round_up(_cdiv(full, 2), 16)
    bt = max(16, min(batch_tile, half))
    bt = _round_up(bt, 16)
    # Prefer an even step count so both v7x TensorCores stay busy on every pair of steps.
    steps = _cdiv(B, bt)
    if steps > 1 and steps % 2 == 1:
        bt_alt = _round_up(_cdiv(full, steps + 1), 16)
        if bt_alt >= 16 and _cdiv(B, bt_alt) % 2 == 0:
            bt = bt_alt
    return bt


def mlp_kernel(x_ref,
               w1_ref, b1_ref,
               w2_ref, b2_ref,
               w3_ref, b3_ref,
               w4_ref, b4_ref,
               w5_ref, b5_ref,
               w6_ref, b6_ref,
               o_ref):
    """Fused forward pass: 5x (Linear + ReLU) + final Linear.

    Matmuls run on the MXU with bf16 operands / f32 accumulation; the f32->bf16 input
    cast, bias add and ReLU stay in f32/VPU slots (slack under the MXU). All layer
    widths are lane-padded to >= 128 so every MXU result tile and the output store are
    lane-dense.
    """

    def dense_relu(h_bf16, w_ref, b_ref):
        y = jnp.dot(h_bf16, w_ref[...], preferred_element_type=jnp.float32)
        y = jnp.maximum(y + b_ref[...], 0.0)           # bias + ReLU in f32
        return y.astype(jnp.bfloat16)                  # bf16 feed for next MXU pass

    h = x_ref[...].astype(jnp.bfloat16)                # (bt, 784) f32 -> bf16 in-kernel
    h = dense_relu(h, w1_ref, b1_ref)                  # (bt, 256)
    h = dense_relu(h, w2_ref, b2_ref)                  # (bt, 128)
    h = dense_relu(h, w3_ref, b3_ref)                  # (bt, 128) [64 real]
    h = dense_relu(h, w4_ref, b4_ref)                  # (bt, 128) [32 real]
    h = dense_relu(h, w5_ref, b5_ref)                  # (bt, 128) [16 real]
    # Final layer: no ReLU; store lane-dense f32 (real logits are columns [:10]).
    y = jnp.dot(h, w6_ref[...], preferred_element_type=jnp.float32) + b6_ref[...]
    o_ref[...] = y


def pad_params(params):
    """Zero-pad weights/biases to lane-padded sizes; weights stored as bf16, biases f32."""
    padded = []
    for (w, b), di, do in zip(params, PAD_IN, PAD_OUT):
        wp = jnp.zeros((di, do), jnp.bfloat16).at[: w.shape[0], : w.shape[1]].set(
            w.astype(jnp.bfloat16))
        bp = jnp.zeros((1, do), jnp.float32).at[:, : b.shape[1]].set(
            b.astype(jnp.float32))
        padded.append((wp, bp))
    return padded


@functools.partial(jax.jit, static_argnames=("batch_tile",))
def mlp_forward(x_nchw, params, *, batch_tile=1024):
    """Run the MLP forward pass.

    x_nchw: (B, 1, 28, 28) float32 (NCHW, like the PyTorch module's input).
    params: list of (W, b) with W shape (in, out) float32 and b shape (1, out) float32.
    Returns: (B, 10) float32 logits.
    """
    B = x_nchw.shape[0]
    bt = _choose_batch_tile(B, batch_tile)
    grid = (_cdiv(B, bt),)                             # ragged last tile is fine:
    # OOB input rows only feed rows that are independent and never stored/kept.

    # Same as torch x.view(-1, 28*28); contiguous reshape, no extra HBM pass, stays f32.
    x2d = x_nchw.reshape(B, IN_DIM)

    padded = pad_params(params)

    # Input/output tiled over the batch; weights/biases fully resident (block (0,0) always).
    in_specs = [pl.BlockSpec((bt, IN_DIM), lambda i: (i, 0))]
    flat_params = []
    for (w, b) in padded:
        in_specs.append(pl.BlockSpec(w.shape, lambda i: (0, 0)))
        in_specs.append(pl.BlockSpec(b.shape, lambda i: (0, 0)))
        flat_params.extend([w, b])
    out_spec = pl.BlockSpec((bt, OUT_PAD), lambda i: (i, 0))

    flops = 2 * B * sum(di * do for di, do in zip(PAD_IN, PAD_OUT))
    bytes_accessed = (B * IN_DIM * 4 + B * OUT_PAD * 4
                      + sum(di * do * 2 + do * 4 for di, do in zip(PAD_IN, PAD_OUT)))

    out = pl.pallas_call(
        mlp_kernel,
        out_shape=jax.ShapeDtypeStruct((B, OUT_PAD), jnp.float32),
        grid_spec=pltpu.PrefetchScalarGridSpec(
            num_scalar_prefetch=0,
            grid=grid,
            in_specs=in_specs,
            out_specs=out_spec,
        ),
        compiler_params=pltpu.CompilerParams(
            dimension_semantics=("parallel",),
            vmem_limit_bytes=32 * 1024 * 1024,   # f32 input tiles fit v5e/v6e/v7x alike
        ),
        cost_estimate=pl.CostEstimate(
            flops=flops, transcendentals=0, bytes_accessed=bytes_accessed),
    )(x2d, *flat_params)

    return out[:, :NUM_CLASSES]


def init_params(key):
    """Deterministic init mimicking nn.Linear's default U(-1/sqrt(fan_in), 1/sqrt(fan_in))."""
    params = []
    for i in range(len(DIMS) - 1):
        fan_in, fan_out = DIMS[i], DIMS[i + 1]
        key, kw, kb = jax.random.split(key, 3)
        bound = 1.0 / float(fan_in) ** 0.5
        w = jax.random.uniform(kw, (fan_in, fan_out), jnp.float32, -bound, bound)
        b = jax.random.uniform(kb, (1, fan_out), jnp.float32, -bound, bound)
        params.append((w, b))
    return params


def mlp_reference(x_nchw, params):
    """Plain-JAX reference in the same mixed precision as the kernel
    (bf16 MXU operands, f32 accumulation, f32 bias add / ReLU)."""
    h = x_nchw.reshape(x_nchw.shape[0], IN_DIM).astype(jnp.bfloat16)
    for i, (w, b) in enumerate(params):
        y = jnp.dot(h, w.astype(jnp.bfloat16), preferred_element_type=jnp.float32) + b
        if i < len(params) - 1:
            h = jnp.maximum(y, 0.0).astype(jnp.bfloat16)
        else:
            h = y
    return h


if __name__ == "__main__":
    key = jax.random.PRNGKey(0)
    key, kx, kp = jax.random.split(key, 3)

    # Small batch, deliberately NOT a multiple of the chosen tile -> exercises the
    # ragged last grid step (bt=32, grid=(2,)) with no wrapper-side padding.
    B = 40
    x = jax.random.normal(kx, (B, 1, 28, 28), jnp.float32)  # NCHW, like MNIST input
    params = init_params(kp)

    out = mlp_forward(x, params)
    out = jax.block_until_ready(out)

    ref = mlp_reference(x, params)
    assert out.shape == (B, NUM_CLASSES), out.shape
    max_err = float(jnp.max(jnp.abs(out - ref)))
    assert jnp.allclose(out, ref, atol=2e-3, rtol=2e-3), f"mismatch vs reference, max_err={max_err}"

    print("KERNEL_OK")
</pallas_src>

<mosaic_0001>
module attributes {stable_mosaic.version = 11 : i64} {
  func.func @mlp_kernel(%arg0: i32, %arg1: memref<32x784xf32, #tpu.memory_space<vmem>>, %arg2: memref<784x256xbf16, #tpu.memory_space<vmem>>, %arg3: memref<1x256xf32, #tpu.memory_space<vmem>>, %arg4: memref<256x128xbf16, #tpu.memory_space<vmem>>, %arg5: memref<1x128xf32, #tpu.memory_space<vmem>>, %arg6: memref<128x128xbf16, #tpu.memory_space<vmem>>, %arg7: memref<1x128xf32, #tpu.memory_space<vmem>>, %arg8: memref<128x128xbf16, #tpu.memory_space<vmem>>, %arg9: memref<1x128xf32, #tpu.memory_space<vmem>>, %arg10: memref<128x128xbf16, #tpu.memory_space<vmem>>, %arg11: memref<1x128xf32, #tpu.memory_space<vmem>>, %arg12: memref<128x128xbf16, #tpu.memory_space<vmem>>, %arg13: memref<1x128xf32, #tpu.memory_space<vmem>>, %arg14: memref<32x128xf32, #tpu.memory_space<vmem>>) attributes {dimension_semantics = [#tpu.dimension_semantics<parallel>], iteration_bounds = array<i64: 2>, scalar_prefetch = 0 : i64, scratch_operands = 0 : i64, tpu.core_type = #tpu.core_type<tc>, window_params = [{transform_indices = @transform_0, window_bounds = array<i64: 32, 784>}, {pipeline_mode = #tpu.pipeline_mode<synchronous>, transform_indices = @transform_1, window_bounds = array<i64: 784, 256>}, {pipeline_mode = #tpu.pipeline_mode<synchronous>, transform_indices = @transform_2, window_bounds = array<i64: 1, 256>}, {pipeline_mode = #tpu.pipeline_mode<synchronous>, transform_indices = @transform_3, window_bounds = array<i64: 256, 128>}, {pipeline_mode = #tpu.pipeline_mode<synchronous>, transform_indices = @transform_4, window_bounds = array<i64: 1, 128>}, {pipeline_mode = #tpu.pipeline_mode<synchronous>, transform_indices = @transform_5, window_bounds = array<i64: 128, 128>}, {pipeline_mode = #tpu.pipeline_mode<synchronous>, transform_indices = @transform_6, window_bounds = array<i64: 1, 128>}, {pipeline_mode = #tpu.pipeline_mode<synchronous>, transform_indices = @transform_7, window_bounds = array<i64: 128, 128>}, {pipeline_mode = #tpu.pipeline_mode<synchronous>, transform_indices = @transform_8, window_bounds = array<i64: 1, 128>}, {pipeline_mode = #tpu.pipeline_mode<synchronous>, transform_indices = @transform_9, window_bounds = array<i64: 128, 128>}, {pipeline_mode = #tpu.pipeline_mode<synchronous>, transform_indices = @transform_10, window_bounds = array<i64: 1, 128>}, {pipeline_mode = #tpu.pipeline_mode<synchronous>, transform_indices = @transform_11, window_bounds = array<i64: 128, 128>}, {pipeline_mode = #tpu.pipeline_mode<synchronous>, transform_indices = @transform_12, window_bounds = array<i64: 1, 128>}, {transform_indices = @transform_13, window_bounds = array<i64: 32, 128>}]} {
    %c0 = arith.constant 0 : index
    %c0_0 = arith.constant 0 : index
    %0 = vector.load %arg1[%c0, %c0_0] : memref<32x784xf32, #tpu.memory_space<vmem>>, vector<32x784xf32>
    %1 = arith.truncf %0 : vector<32x784xf32> to vector<32x784xbf16>
    %c0_1 = arith.constant 0 : index
    %c0_2 = arith.constant 0 : index
    %2 = vector.load %arg2[%c0_1, %c0_2] : memref<784x256xbf16, #tpu.memory_space<vmem>>, vector<784x256xbf16>
    %cst = arith.constant dense<0.000000e+00> : vector<32x256xf32>
    %3 = tpu.matmul %1, %2, %cst {dimension_numbers = #tpu.dot_dimension_numbers<[1], [0], [0], [1], [0, 0, 1, 1], [], []>} : vector<32x784xbf16>, vector<784x256xbf16>, vector<32x256xf32> -> vector<32x256xf32>
    %c0_3 = arith.constant 0 : index
    %c0_4 = arith.constant 0 : index
    %4 = vector.load %arg3[%c0_3, %c0_4] : memref<1x256xf32, #tpu.memory_space<vmem>>, vector<1x256xf32>
    %5 = vector.broadcast %4 : vector<1x256xf32> to vector<32x256xf32>
    %6 = arith.addf %3, %5 : vector<32x256xf32>
    %cst_5 = arith.constant 0.000000e+00 : f32
    %7 = vector.broadcast %cst_5 : f32 to vector<32x256xf32>
    %8 = arith.maximumf %6, %7 : vector<32x256xf32>
    %9 = arith.truncf %8 : vector<32x256xf32> to vector<32x256xbf16>
    %c0_6 = arith.constant 0 : index
    %c0_7 = arith.constant 0 : index
    %10 = vector.load %arg4[%c0_6, %c0_7] : memref<256x128xbf16, #tpu.memory_space<vmem>>, vector<256x128xbf16>
    %cst_8 = arith.constant dense<0.000000e+00> : vector<32x128xf32>
    %11 = tpu.matmul %9, %10, %cst_8 {dimension_numbers = #tpu.dot_dimension_numbers<[1], [0], [0], [1], [0, 0, 1, 1], [], []>} : vector<32x256xbf16>, vector<256x128xbf16>, vector<32x128xf32> -> vector<32x128xf32>
    %c0_9 = arith.constant 0 : index
    %c0_10 = arith.constant 0 : index
    %12 = vector.load %arg5[%c0_9, %c0_10] : memref<1x128xf32, #tpu.memory_space<vmem>>, vector<1x128xf32>
    %13 = vector.broadcast %12 : vector<1x128xf32> to vector<32x128xf32>
    %14 = arith.addf %11, %13 : vector<32x128xf32>
    %cst_11 = arith.constant 0.000000e+00 : f32
    %15 = vector.broadcast %cst_11 : f32 to vector<32x128xf32>
    %16 = arith.maximumf %14, %15 : vector<32x128xf32>
    %17 = arith.truncf %16 : vector<32x128xf32> to vector<32x128xbf16>
    %c0_12 = arith.constant 0 : index
    %c0_13 = arith.constant 0 : index
    %18 = vector.load %arg6[%c0_12, %c0_13] : memref<128x128xbf16, #tpu.memory_space<vmem>>, vector<128x128xbf16>
    %cst_14 = arith.constant dense<0.000000e+00> : vector<32x128xf32>
    %19 = tpu.matmul %17, %18, %cst_14 {dimension_numbers = #tpu.dot_dimension_numbers<[1], [0], [0], [1], [0, 0, 1, 1], [], []>} : vector<32x128xbf16>, vector<128x128xbf16>, vector<32x128xf32> -> vector<32x128xf32>
    %c0_15 = arith.constant 0 : index
    %c0_16 = arith.constant 0 : index
    %20 = vector.load %arg7[%c0_15, %c0_16] : memref<1x128xf32, #tpu.memory_space<vmem>>, vector<1x128xf32>
    %21 = vector.broadcast %20 : vector<1x128xf32> to vector<32x128xf32>
    %22 = arith.addf %19, %21 : vector<32x128xf32>
    %cst_17 = arith.constant 0.000000e+00 : f32
    %23 = vector.broadcast %cst_17 : f32 to vector<32x128xf32>
    %24 = arith.maximumf %22, %23 : vector<32x128xf32>
    %25 = arith.truncf %24 : vector<32x128xf32> to vector<32x128xbf16>
    %c0_18 = arith.constant 0 : index
    %c0_19 = arith.constant 0 : index
    %26 = vector.load %arg8[%c0_18, %c0_19] : memref<128x128xbf16, #tpu.memory_space<vmem>>, vector<128x128xbf16>
    %cst_20 = arith.constant dense<0.000000e+00> : vector<32x128xf32>
    %27 = tpu.matmul %25, %26, %cst_20 {dimension_numbers = #tpu.dot_dimension_numbers<[1], [0], [0], [1], [0, 0, 1, 1], [], []>} : vector<32x128xbf16>, vector<128x128xbf16>, vector<32x128xf32> -> vector<32x128xf32>
    %c0_21 = arith.constant 0 : index
    %c0_22 = arith.constant 0 : index
    %28 = vector.load %arg9[%c0_21, %c0_22] : memref<1x128xf32, #tpu.memory_space<vmem>>, vector<1x128xf32>
    %29 = vector.broadcast %28 : vector<1x128xf32> to vector<32x128xf32>
    %30 = arith.addf %27, %29 : vector<32x128xf32>
    %cst_23 = arith.constant 0.000000e+00 : f32
    %31 = vector.broadcast %cst_23 : f32 to vector<32x128xf32>
    %32 = arith.maximumf %30, %31 : vector<32x128xf32>
    %33 = arith.truncf %32 : vector<32x128xf32> to vector<32x128xbf16>
    %c0_24 = arith.constant 0 : index
    %c0_25 = arith.constant 0 : index
    %34 = vector.load %arg10[%c0_24, %c0_25] : memref<128x128xbf16, #tpu.memory_space<vmem>>, vector<128x128xbf16>
    %cst_26 = arith.constant dense<0.000000e+00> : vector<32x128xf32>
    %35 = tpu.matmul %33, %34, %cst_26 {dimension_numbers = #tpu.dot_dimension_numbers<[1], [0], [0], [1], [0, 0, 1, 1], [], []>} : vector<32x128xbf16>, vector<128x128xbf16>, vector<32x128xf32> -> vector<32x128xf32>
    %c0_27 = arith.constant 0 : index
    %c0_28 = arith.constant 0 : index
    %36 = vector.load %arg11[%c0_27, %c0_28] : memref<1x128xf32, #tpu.memory_space<vmem>>, vector<1x128xf32>
    %37 = vector.broadcast %36 : vector<1x128xf32> to vector<32x128xf32>
    %38 = arith.addf %35, %37 : vector<32x128xf32>
    %cst_29 = arith.constant 0.000000e+00 : f32
    %39 = vector.broadcast %cst_29 : f32 to vector<32x128xf32>
    %40 = arith.maximumf %38, %39 : vector<32x128xf32>
    %41 = arith.truncf %40 : vector<32x128xf32> to vector<32x128xbf16>
    %c0_30 = arith.constant 0 : index
    %c0_31 = arith.constant 0 : index
    %42 = vector.load %arg12[%c0_30, %c0_31] : memref<128x128xbf16, #tpu.memory_space<vmem>>, vector<128x128xbf16>
    %cst_32 = arith.constant dense<0.000000e+00> : vector<32x128xf32>
    %43 = tpu.matmul %41, %42, %cst_32 {dimension_numbers = #tpu.dot_dimension_numbers<[1], [0], [0], [1], [0, 0, 1, 1], [], []>} : vector<32x128xbf16>, vector<128x128xbf16>, vector<32x128xf32> -> vector<32x128xf32>
    %c0_33 = arith.constant 0 : index
    %c0_34 = arith.constant 0 : index
    %44 = vector.load %arg13[%c0_33, %c0_34] : memref<1x128xf32, #tpu.memory_space<vmem>>, vector<1x128xf32>
    %45 = vector.broadcast %44 : vector<1x128xf32> to vector<32x128xf32>
    %46 = arith.addf %43, %45 : vector<32x128xf32>
    %c0_35 = arith.constant 0 : index
    %c0_36 = arith.constant 0 : index
    %47 = vector.load %arg14[%c0_35, %c0_36] : memref<32x128xf32, #tpu.memory_space<vmem>>, vector<32x128xf32>
    tpu.vector_store %arg14[%c0_35, %c0_36], %46 {strides = array<i32>} : memref<32x128xf32, #tpu.memory_space<vmem>>, vector<32x128xf32>,
    return
  }
  func.func @transform_0(%arg0: i32) -> (i32, i32) {
    %c0_i32 = arith.constant 0 : i32
    %c0_i32_0 = arith.constant 0 : i32
    return %arg0, %c0_i32 : i32, i32
  }
  func.func @transform_1(%arg0: i32) -> (i32, i32) {
    %c0_i32 = arith.constant 0 : i32
    %c0_i32_0 = arith.constant 0 : i32
    %c0_i32_1 = arith.constant 0 : i32
    return %c0_i32, %c0_i32_0 : i32, i32
  }
  func.func @transform_2(%arg0: i32) -> (i32, i32) {
    %c0_i32 = arith.constant 0 : i32
    %c0_i32_0 = arith.constant 0 : i32
    %c0_i32_1 = arith.constant 0 : i32
    return %c0_i32, %c0_i32_0 : i32, i32
  }
  func.func @transform_3(%arg0: i32) -> (i32, i32) {
    %c0_i32 = arith.constant 0 : i32
    %c0_i32_0 = arith.constant 0 : i32
    %c0_i32_1 = arith.constant 0 : i32
    return %c0_i32, %c0_i32_0 : i32, i32
  }
  func.func @transform_4(%arg0: i32) -> (i32, i32) {
    %c0_i32 = arith.constant 0 : i32
    %c0_i32_0 = arith.constant 0 : i32
    %c0_i32_1 = arith.constant 0 : i32
    return %c0_i32, %c0_i32_0 : i32, i32
  }
  func.func @transform_5(%arg0: i32) -> (i32, i32) {
    %c0_i32 = arith.constant 0 : i32
    %c0_i32_0 = arith.constant 0 : i32
    %c0_i32_1 = arith.constant 0 : i32
    return %c0_i32, %c0_i32_0 : i32, i32
  }
  func.func @transform_6(%arg0: i32) -> (i32, i32) {
    %c0_i32 = arith.constant 0 : i32
    %c0_i32_0 = arith.constant 0 : i32
    %c0_i32_1 = arith.constant 0 : i32
    return %c0_i32, %c0_i32_0 : i32, i32
  }
  func.func @transform_7(%arg0: i32) -> (i32, i32) {
    %c0_i32 = arith.constant 0 : i32
    %c0_i32_0 = arith.constant 0 : i32
    %c0_i32_1 = arith.constant 0 : i32
    return %c0_i32, %c0_i32_0 : i32, i32
  }
  func.func @transform_8(%arg0: i32) -> (i32, i32) {
    %c0_i32 = arith.constant 0 : i32
    %c0_i32_0 = arith.constant 0 : i32
    %c0_i32_1 = arith.constant 0 : i32
    return %c0_i32, %c0_i32_0 : i32, i32
  }
  func.func @transform_9(%arg0: i32) -> (i32, i32) {
    %c0_i32 = arith.constant 0 : i32
    %c0_i32_0 = arith.constant 0 : i32
    %c0_i32_1 = arith.constant 0 : i32
    return %c0_i32, %c0_i32_0 : i32, i32
  }
  func.func @transform_10(%arg0: i32) -> (i32, i32) {
    %c0_i32 = arith.constant 0 : i32
    %c0_i32_0 = arith.constant 0 : i32
    %c0_i32_1 = arith.constant 0 : i32
    return %c0_i32, %c0_i32_0 : i32, i32
  }
  func.func @transform_11(%arg0: i32) -> (i32, i32) {
    %c0_i32 = arith.constant 0 : i32
    %c0_i32_0 = arith.constant 0 : i32
    %c0_i32_1 = arith.constant 0 : i32
    return %c0_i32, %c0_i32_0 : i32, i32
  }
  func.func @transform_12(%arg0: i32) -> (i32, i32) {
    %c0_i32 = arith.constant 0 : i32
    %c0_i32_0 = arith.constant 0 : i32
    %c0_i32_1 = arith.constant 0 : i32
    return %c0_i32, %c0_i32_0 : i32, i32
  }
  func.func @transform_13(%arg0: i32) -> (i32, i32) {
    %c0_i32 = arith.constant 0 : i32
    %c0_i32_0 = arith.constant 0 : i32
    return %arg0, %c0_i32 : i32, i32
  }
}

</mosaic_0001>

<llo_original>
// kernel: mlp_forward.1
$region0: #{mlp_forward.1}
  #allocation0 [shape = 'u32[]', space=smem, size = 0x4, offset = 0x4, fixed_abs, tag = 'smem constant byte address 0x4 - core index']
  #allocation1 [shape = 'u32[72,128]{1,0:T(1,128)}', space=vmem, size = 0x9000, scoped, tag = 'internal scratch']
  %s0 = inlined_call_operand.vmem [shape: f32[40,784], index: 0, kind: input, shape index: {}]
  %s1 = inlined_call_operand.vmem [shape: bf16[784,256], index: 1, kind: input, shape index: {}]
  %s2 = inlined_call_operand.vmem [shape: f32[1,256], index: 2, kind: input, shape index: {}]
  %s3 = inlined_call_operand.vmem [shape: bf16[256,128], index: 3, kind: input, shape index: {}]
  %s4 = inlined_call_operand.vmem [shape: f32[1,128], index: 4, kind: input, shape index: {}]
  %s5 = inlined_call_operand.vmem [shape: bf16[128,128], index: 5, kind: input, shape index: {}]
  %s6 = inlined_call_operand.vmem [shape: f32[1,128], index: 6, kind: input, shape index: {}]
  %s7 = inlined_call_operand.vmem [shape: bf16[128,128], index: 7, kind: input, shape index: {}]
  %s8 = inlined_call_operand.vmem [shape: f32[1,128], index: 8, kind: input, shape index: {}]
  %s9 = inlined_call_operand.vmem [shape: bf16[128,128], index: 9, kind: input, shape index: {}]
  %s10 = inlined_call_operand.vmem [shape: f32[1,128], index: 10, kind: input, shape index: {}]
  %s11 = inlined_call_operand.vmem [shape: bf16[128,128], index: 11, kind: input, shape index: {}]
  %s12 = inlined_call_operand.vmem [shape: f32[1,128], index: 12, kind: input, shape index: {}]
  %s13 = inlined_call_operand.vmem [shape: f32[40,128], index: 13, kind: output, shape index: {}]
  %s14 = sld [smem:[#allocation0]]
  $region133: #{mlp_forward.1} parent=0
    _
  %s16 = ssub.s32 1, %s14
  %s17 = scalar_select 0, %s16, %s14
  $region1: #{mlp_forward.1} parent=0
    #allocation2 [shape = 'u8[32768]{0}', space=vmem, size = 0x8000, scoped, tag = 'output window, operand 0']
    loop: start=0, step=1, limit=4
    $region2: #{mlp_forward.1} parent=1 // loop_pre_header
      _
    $region3: #{mlp_forward.1} parent=1 // loop_header
      %s19 = sphi 0, %s23
      %p20 = scmp.ge.s32.totalorder %s19, 4
      %s29 = sphi 0, %s31
      %s32 = sphi 0, %s29
      %s33 = sphi 0, %s32
      %s49 = sphi 0, %s33
      %s53 = sphi 0, %s53
      %s55 = sphi 0, %s53
      %s56 = sphi 0, %s55
      %s70 = sphi 0, %s56
      %s74 = sphi 0, %s74
      %s76 = sphi 0, %s74
      %s77 = sphi 0, %s76
      %s91 = sphi 0, %s77
      %s95 = sphi 0, %s95
      %s97 = sphi 0, %s95
      %s98 = sphi 0, %s97
      %s112 = sphi 0, %s98
      %s116 = sphi 0, %s116
      %s118 = sphi 0, %s116
      %s119 = sphi 0, %s118
      %s133 = sphi 0, %s119
      %s137 = sphi 0, %s137
      %s139 = sphi 0, %s137
      %s140 = sphi 0, %s139
      %s154 = sphi 0, %s140
      %s158 = sphi 0, %s158
      %s160 = sphi 0, %s158
      %s161 = sphi 0, %s160
      %s175 = sphi 0, %s161
      %s179 = sphi 0, %s179
      %s181 = sphi 0, %s179
      %s182 = sphi 0, %s181
      %s196 = sphi 0, %s182
      %s200 = sphi 0, %s200
      %s202 = sphi 0, %s200
      %s203 = sphi 0, %s202
      %s217 = sphi 0, %s203
      %s221 = sphi 0, %s221
      %s223 = sphi 0, %s221
      %s224 = sphi 0, %s223
      %s238 = sphi 0, %s224
      %s242 = sphi 0, %s242
      %s244 = sphi 0, %s242
      %s245 = sphi 0, %s244
      %s259 = sphi 0, %s245
      %s263 = sphi 0, %s263
      %s265 = sphi 0, %s263
      %s266 = sphi 0, %s265
      %s280 = sphi 0, %s266
      %s284 = sphi 0, %s284
      %s286 = sphi 0, %s284
      %s287 = sphi 0, %s286
      %s301 = sphi 0, %s287
      %s307 = sphi 0, %s309
      %s310 = sphi 0, %s307
      %s311 = sphi 0, %s310
      %s327 = sphi 0, %s311
    $region4: #{mlp_forward.1} parent=1 // loop_header_branch
      %22 = sbr.rel (%p20) target = $region8
    $region5: #{mlp_forward.1} parent=1 // loop_body
      %s24 = ssub.s32 %s19, 1
      %s25 = ssub.s32 %s19, 2
      %s26 = sadd.s32 %s19, 1
      %s27 = ssub.s32 %s19, %s26
      %p28 = scmp.eq.s32.totalorder %s27, 0
      %s30 = sadd.s32 %s29, 1
      %s31 = scalar_select %p28, %s29, %s30
      %p34 = pneg %p28
      %p35 = scmp.eq.s32.totalorder %s19, 1
      %p36 = por %p34, %p35
      %p37 = scmp.ne.s32.totalorder %s29, %s32
      %p38 = scmp.eq.s32.totalorder %s19, 0
      %p39 = por %p37, %p38
      %p40 = scmp.ne.s32.totalorder %s29, %s32
      %p41 = scmp.eq.s32.totalorder %s24, 1
      %p42 = por %p40, %p41
      %p43 = scmp.ne.s32.totalorder %s32, %s33
      %p44 = scmp.eq.s32.totalorder %s24, 0
      %p45 = por %p43, %p44
      %p46 = scmp.ne.s32.totalorder %s32, %s33
      %p47 = scmp.eq.s32.totalorder %s25, 1
      %p48 = por %p46, %p47
      %p50 = scmp.ne.s32.totalorder %s33, %s49
      %p51 = scmp.eq.s32.totalorder %s25, 0
      %p52 = por %p50, %p51
      %s54 = sadd.s32 %s53, 1
      %p57 = scmp.eq.s32.totalorder %s19, 1
      %p58 = scmp.ne.s32.totalorder %s53, %s55
      %p59 = scmp.eq.s32.totalorder %s19, 0
      %p60 = por %p58, %p59
      %p61 = scmp.ne.s32.totalorder %s53, %s55
      %p62 = scmp.eq.s32.totalorder %s24, 1
      %p63 = por %p61, %p62
      %p64 = scmp.ne.s32.totalorder %s55, %s56
      %p65 = scmp.eq.s32.totalorder %s24, 0
      %p66 = por %p64, %p65
      %p67 = scmp.ne.s32.totalorder %s55, %s56
      %p68 = scmp.eq.s32.totalorder %s25, 1
      %p69 = por %p67, %p68
      %p71 = scmp.ne.s32.totalorder %s56, %s70
      %p72 = scmp.eq.s32.totalorder %s25, 0
      %p73 = por %p71, %p72
      %s75 = sadd.s32 %s74, 1
      %p78 = scmp.eq.s32.totalorder %s19, 1
      %p79 = scmp.ne.s32.totalorder %s74, %s76
      %p80 = scmp.eq.s32.totalorder %s19, 0
      %p81 = por %p79, %p80
      %p82 = scmp.ne.s32.totalorder %s74, %s76
      %p83 = scmp.eq.s32.totalorder %s24, 1
      %p84 = por %p82, %p83
      %p85 = scmp.ne.s32.totalorder %s76, %s77
      %p86 = scmp.eq.s32.totalorder %s24, 0
      %p87 = por %p85, %p86
      %p88 = scmp.ne.s32.totalorder %s76, %s77
      %p89 = scmp.eq.s32.totalorder %s25, 1
      %p90 = por %p88, %p89
      %p92 = scmp.ne.s32.totalorder %s77, %s91
      %p93 = scmp.eq.s32.totalorder %s25, 0
      %p94 = por %p92, %p93
      %s96 = sadd.s32 %s95, 1
      %p99 = scmp.eq.s32.totalorder %s19, 1
      %p100 = scmp.ne.s32.totalorder %s95, %s97
      %p101 = scmp.eq.s32.totalorder %s19, 0
      %p102 = por %p100, %p101
      %p103 = scmp.ne.s32.totalorder %s95, %s97
      %p104 = scmp.eq.s32.totalorder %s24, 1
      %p105 = por %p103, %p104
      %p106 = scmp.ne.s32.totalorder %s97, %s98
      %p107 = scmp.eq.s32.totalorder %s24, 0
      %p108 = por %p106, %p107
      %p109 = scmp.ne.s32.totalorder %s97, %s98
      %p110 = scmp.eq.s32.totalorder %s25, 1
      %p111 = por %p109, %p110
      %p113 = scmp.ne.s32.totalorder %s98, %s112
      %p114 = scmp.eq.s32.totalorder %s25, 0
      %p115 = por %p113, %p114
      %s117 = sadd.s32 %s116, 1
      %p120 = scmp.eq.s32.totalorder %s19, 1
      %p121 = scmp.ne.s32.totalorder %s116, %s118
      %p122 = scmp.eq.s32.totalorder %s19, 0
      %p123 = por %p121, %p122
      %p124 = scmp.ne.s32.totalorder %s116, %s118
      %p125 = scmp.eq.s32.totalorder %s24, 1
      %p126 = por %p124, %p125
      %p127 = scmp.ne.s32.totalorder %s118, %s119
      %p128 = scmp.eq.s32.totalorder %s24, 0
      %p129 = por %p127, %p128
      %p130 = scmp.ne.s32.totalorder %s118, %s119
      %p131 = scmp.eq.s32.totalorder %s25, 1
      %p132 = por %p130, %p131
      %p134 = scmp.ne.s32.totalorder %s119, %s133
      %p135 = scmp.eq.s32.totalorder %s25, 0
      %p136 = por %p134, %p135
      %s138 = sadd.s32 %s137, 1
      %p141 = scmp.eq.s32.totalorder %s19, 1
      %p142 = scmp.ne.s32.totalorder %s137, %s139
      %p143 = scmp.eq.s32.totalorder %s19, 0
      %p144 = por %p142, %p143
      %p145 = scmp.ne.s32.totalorder %s137, %s139
      %p146 = scmp.eq.s32.totalorder %s24, 1
      %p147 = por %p145, %p146
      %p148 = scmp.ne.s32.totalorder %s139, %s140
      %p149 = scmp.eq.s32.totalorder %s24, 0
      %p150 = por %p148, %p149
      %p151 = scmp.ne.s32.totalorder %s139, %s140
      %p152 = scmp.eq.s32.totalorder %s25, 1
      %p153 = por %p151, %p152
      %p155 = scmp.ne.s32.totalorder %s140, %s154
      %p156 = scmp.eq.s32.totalorder %s25, 0
      %p157 = por %p155, %p156
      %s159 = sadd.s32 %s158, 1
      %p162 = scmp.eq.s32.totalorder %s19, 1
      %p163 = scmp.ne.s32.totalorder %s158, %s160
      %p164 = scmp.eq.s32.totalorder %s19, 0
      %p165 = por %p163, %p164
      %p166 = scmp.ne.s32.totalorder %s158, %s160
      %p167 = scmp.eq.s32.totalorder %s24, 1
      %p168 = por %p166, %p167
      %p169 = scmp.ne.s32.totalorder %s160, %s161
      %p170 = scmp.eq.s32.totalorder %s24, 0
      %p171 = por %p169, %p170
      %p172 = scmp.ne.s32.totalorder %s160, %s161
      %p173 = scmp.eq.s32.totalorder %s25, 1
      %p174 = por %p172, %p173
      %p176 = scmp.ne.s32.totalorder %s161, %s175
      %p177 = scmp.eq.s32.totalorder %s25, 0
      %p178 = por %p176, %p177
      %s180 = sadd.s32 %s179, 1
      %p183 = scmp.eq.s32.totalorder %s19, 1
      %p184 = scmp.ne.s32.totalorder %s179, %s181
      %p185 = scmp.eq.s32.totalorder %s19, 0
      %p186 = por %p184, %p185
      %p187 = scmp.ne.s32.totalorder %s179, %s181
      %p188 = scmp.eq.s32.totalorder %s24, 1
      %p189 = por %p187, %p188
      %p190 = scmp.ne.s32.totalorder %s181, %s182
      %p191 = scmp.eq.s32.totalorder %s24, 0
      %p192 = por %p190, %p191
      %p193 = scmp.ne.s32.totalorder %s181, %s182
      %p194 = scmp.eq.s32.totalorder %s25, 1
      %p195 = por %p193, %p194
      %p197 = scmp.ne.s32.totalorder %s182, %s196
      %p198 = scmp.eq.s32.totalorder %s25, 0
      %p199 = por %p197, %p198
      %s201 = sadd.s32 %s200, 1
      %p204 = scmp.eq.s32.totalorder %s19, 1
      %p205 = scmp.ne.s32.totalorder %s200, %s202
      %p206 = scmp.eq.s32.totalorder %s19, 0
      %p207 = por %p205, %p206
      %p208 = scmp.ne.s32.totalorder %s200, %s202
      %p209 = scmp.eq.s32.totalorder %s24, 1
      %p210 = por %p208, %p209
      %p211 = scmp.ne.s32.totalorder %s202, %s203
      %p212 = scmp.eq.s32.totalorder %s24, 0
      %p213 = por %p211, %p212
      %p214 = scmp.ne.s32.totalorder %s202, %s203
      %p215 = scmp.eq.s32.totalorder %s25, 1
      %p216 = por %p214, %p215
      %p218 = scmp.ne.s32.totalorder %s203, %s217
      %p219 = scmp.eq.s32.totalorder %s25, 0
      %p220 = por %p218, %p219
      %s222 = sadd.s32 %s221, 1
      %p225 = scmp.eq.s32.totalorder %s19, 1
      %p226 = scmp.ne.s32.totalorder %s221, %s223
      %p227 = scmp.eq.s32.totalorder %s19, 0
      %p228 = por %p226, %p227
      %p229 = scmp.ne.s32.totalorder %s221, %s223
      %p230 = scmp.eq.s32.totalorder %s24, 1
      %p231 = por %p229, %p230
      %p232 = scmp.ne.s32.totalorder %s223, %s224
      %p233 = scmp.eq.s32.totalorder %s24, 0
      %p234 = por %p232, %p233
      %p235 = scmp.ne.s32.totalorder %s223, %s224
      %p236 = scmp.eq.s32.totalorder %s25, 1
      %p237 = por %p235, %p236
      %p239 = scmp.ne.s32.totalorder %s224, %s238
      %p240 = scmp.eq.s32.totalorder %s25, 0
      %p241 = por %p239, %p240
      %s243 = sadd.s32 %s242, 1
      %p246 = scmp.eq.s32.totalorder %s19, 1
      %p247 = scmp.ne.s32.totalorder %s242, %s244
      %p248 = scmp.eq.s32.totalorder %s19, 0
      %p249 = por %p247, %p248
      %p250 = scmp.ne.s32.totalorder %s242, %s244
      %p251 = scmp.eq.s32.totalorder %s24, 1
      %p252 = por %p250, %p251
      %p253 = scmp.ne.s32.totalorder %s244, %s245
      %p254 = scmp.eq.s32.totalorder %s24, 0
      %p255 = por %p253, %p254
      %p256 = scmp.ne.s32.totalorder %s244, %s245
      %p257 = scmp.eq.s32.totalorder %s25, 1
      %p258 = por %p256, %p257
      %p260 = scmp.ne.s32.totalorder %s245, %s259
      %p261 = scmp.eq.s32.totalorder %s25, 0
      %p262 = por %p260, %p261
      %s264 = sadd.s32 %s263, 1
      %p267 = scmp.eq.s32.totalorder %s19, 1
      %p268 = scmp.ne.s32.totalorder %s263, %s265
      %p269 = scmp.eq.s32.totalorder %s19, 0
      %p270 = por %p268, %p269
      %p271 = scmp.ne.s32.totalorder %s263, %s265
      %p272 = scmp.eq.s32.totalorder %s24, 1
      %p273 = por %p271, %p272
      %p274 = scmp.ne.s32.totalorder %s265, %s266
      %p275 = scmp.eq.s32.totalorder %s24, 0
      %p276 = por %p274, %p275
      %p277 = scmp.ne.s32.totalorder %s265, %s266
      %p278 = scmp.eq.s32.totalorder %s25, 1
      %p279 = por %p277, %p278
      %p281 = scmp.ne.s32.totalorder %s266, %s280
      %p282 = scmp.eq.s32.totalorder %s25, 0
      %p283 = por %p281, %p282
      %s285 = sadd.s32 %s284, 1
      %p288 = scmp.eq.s32.totalorder %s19, 1
      %p289 = scmp.ne.s32.totalorder %s284, %s286
      %p290 = scmp.eq.s32.totalorder %s19, 0
      %p291 = por %p289, %p290
      %p292 = scmp.ne.s32.totalorder %s284, %s286
      %p293 = scmp.eq.s32.totalorder %s24, 1
      %p294 = por %p292, %p293
      %p295 = scmp.ne.s32.totalorder %s286, %s287
      %p296 = scmp.eq.s32.totalorder %s24, 0
      %p297 = por %p295, %p296
      %p298 = scmp.ne.s32.totalorder %s286, %s287
      %p299 = scmp.eq.s32.totalorder %s25, 1
      %p300 = por %p298, %p299
      %p302 = scmp.ne.s32.totalorder %s287, %s301
      %p303 = scmp.eq.s32.totalorder %s25, 0
      %p304 = por %p302, %p303
      %s305 = ssub.s32 %s19, %s26
      %p306 = scmp.eq.s32.totalorder %s305, 0
      %s308 = sadd.s32 %s307, 1
      %s309 = scalar_select %p306, %s307, %s308
      %p312 = pneg %p306
      %p313 = scmp.eq.s32.totalorder %s19, 1
      %p314 = por %p312, %p313
      %p315 = scmp.ne.s32.totalorder %s307, %s310
      %p316 = scmp.eq.s32.totalorder %s19, 0
      %p317 = por %p315, %p316
      %p318 = scmp.ne.s32.totalorder %s307, %s310
      %p319 = scmp.eq.s32.totalorder %s24, 1
      %p320 = por %p318, %p319
      %p321 = scmp.ne.s32.totalorder %s310, %s311
      %p322 = scmp.eq.s32.totalorder %s24, 0
      %p323 = por %p321, %p322
      %p324 = scmp.ne.s32.totalorder %s310, %s311
      %p325 = scmp.eq.s32.totalorder %s25, 1
      %p326 = por %p324, %p325
      %p328 = scmp.ne.s32.totalorder %s311, %s327
      %p329 = scmp.eq.s32.totalorder %s25, 0
      %p330 = por %p328, %p329
      %p331 = scmp.le.s32.totalorder 1, %s19
      %p332 = scmp.lt.s32.totalorder %s19, 3
      %p333 = pnand %p331, %p332
      %p334 = pneg %p333
      // Predicated region
      $region9: #{mlp_forward.1} parent=5 // pred_check
        _
      $region10: #{mlp_forward.1} parent=5 // pred_check_branch
        %336 = sbr.rel (%p333) target = $region12
      $region11: #{mlp_forward.1} parent=5 // pred_region
        %s337 = ssub.s32 %s19, 1
        // Predicated region
        $region13: #{mlp_forward.1} parent=11 // pred_check
          %p338 = pneg %p66
        $region14: #{mlp_forward.1} parent=11 // pred_check_branch
          %340 = sbr.rel (%p338) target = $region16
        $region15: #{mlp_forward.1} parent=11 // pred_region
          _
        $region16: #{mlp_forward.1} parent=11 // pred_fallthru
          _
        // Predicated region
        $region17: #{mlp_forward.1} parent=11 // pred_check
          %p341 = pneg %p87
        $region18: #{mlp_forward.1} parent=11 // pred_check_branch
          %343 = sbr.rel (%p341) target = $region20
        $region19: #{mlp_forward.1} parent=11 // pred_region
          _
        $region20: #{mlp_forward.1} parent=11 // pred_fallthru
          _
        // Predicated region
        $region21: #{mlp_forward.1} parent=11 // pred_check
          %p344 = pneg %p108
        $region22: #{mlp_forward.1} parent=11 // pred_check_branch
          %346 = sbr.rel (%p344) target = $region24
        $region23: #{mlp_forward.1} parent=11 // pred_region
          _
        $region24: #{mlp_forward.1} parent=11 // pred_fallthru
          _
        // Predicated region
        $region25: #{mlp_forward.1} parent=11 // pred_check
          %p347 = pneg %p129
        $region26: #{mlp_forward.1} parent=11 // pred_check_branch
          %349 = sbr.rel (%p347) target = $region28
        $region27: #{mlp_forward.1} parent=11 // pred_region
          _
        $region28: #{mlp_forward.1} parent=11 // pred_fallthru
          _
        // Predicated region
        $region29: #{mlp_forward.1} parent=11 // pred_check
          %p350 = pneg %p150
        $region30: #{mlp_forward.1} parent=11 // pred_check_branch
          %352 = sbr.rel (%p350) target = $region32
        $region31: #{mlp_forward.1} parent=11 // pred_region
          _
        $region32: #{mlp_forward.1} parent=11 // pred_fallthru
          _
        // Predicated region
        $region33: #{mlp_forward.1} parent=11 // pred_check
          %p353 = pneg %p171
        $region34: #{mlp_forward.1} parent=11 // pred_check_branch
          %355 = sbr.rel (%p353) target = $region36
        $region35: #{mlp_forward.1} parent=11 // pred_region
          _
        $region36: #{mlp_forward.1} parent=11 // pred_fallthru
          _
        // Predicated region
        $region37: #{mlp_forward.1} parent=11 // pred_check
          %p356 = pneg %p192
        $region38: #{mlp_forward.1} parent=11 // pred_check_branch
          %358 = sbr.rel (%p356) target = $region40
        $region39: #{mlp_forward.1} parent=11 // pred_region
          _
        $region40: #{mlp_forward.1} parent=11 // pred_fallthru
          _
        // Predicated region
        $region41: #{mlp_forward.1} parent=11 // pred_check
          %p359 = pneg %p213
        $region42: #{mlp_forward.1} parent=11 // pred_check_branch
          %361 = sbr.rel (%p359) target = $region44
        $region43: #{mlp_forward.1} parent=11 // pred_region
          _
        $region44: #{mlp_forward.1} parent=11 // pred_fallthru
          _
        // Predicated region
        $region45: #{mlp_forward.1} parent=11 // pred_check
          %p362 = pneg %p234
        $region46: #{mlp_forward.1} parent=11 // pred_check_branch
          %364 = sbr.rel (%p362) target = $region48
        $region47: #{mlp_forward.1} parent=11 // pred_region
          _
        $region48: #{mlp_forward.1} parent=11 // pred_fallthru
          _
        // Predicated region
        $region49: #{mlp_forward.1} parent=11 // pred_check
          %p365 = pneg %p255
        $region50: #{mlp_forward.1} parent=11 // pred_check_branch
          %367 = sbr.rel (%p365) target = $region52
        $region51: #{mlp_forward.1} parent=11 // pred_region
          _
        $region52: #{mlp_forward.1} parent=11 // pred_fallthru
          _
        // Predicated region
        $region53: #{mlp_forward.1} parent=11 // pred_check
          %p368 = pneg %p276
        $region54: #{mlp_forward.1} parent=11 // pred_check_branch
          %370 = sbr.rel (%p368) target = $region56
        $region55: #{mlp_forward.1} parent=11 // pred_region
          _
        $region56: #{mlp_forward.1} parent=11 // pred_fallthru
          _
        // Predicated region
        $region57: #{mlp_forward.1} parent=11 // pred_check
          %p371 = pneg %p297
        $region58: #{mlp_forward.1} parent=11 // pred_check_branch
          %373 = sbr.rel (%p371) target = $region60
        $region59: #{mlp_forward.1} parent=11 // pred_region
          _
        $region60: #{mlp_forward.1} parent=11 // pred_fallthru
          _
      $region12: #{mlp_forward.1} parent=5 // pred_fallthru
        _
      %p374 = scmp.lt.s32.totalorder %s19, 2
      // Predicated region
      $region61: #{mlp_forward.1} parent=5 // pred_check
        %p375 = pneg %p374
      $region62: #{mlp_forward.1} parent=5 // pred_check_branch
        %377 = sbr.rel (%p375) target = $region64
      $region63: #{mlp_forward.1} parent=5 // pred_region
        // Predicated region
        $region65: #{mlp_forward.1} parent=63 // pred_check
          %p378 = pneg %p39
        $region66: #{mlp_forward.1} parent=63 // pred_check_branch
          %380 = sbr.rel (%p378) target = $region68
        $region67: #{mlp_forward.1} parent=63 // pred_region
          %s381 = smul.u32 4, %s19
          %s382 = ssub.s32 5, %s381
          %p383 = scmp.lt.s32.totalorder %s382, 4
          %s384 = scalar_select %p383, %s382, 4
          %s385 = smul.u32 8, %s384
          %s386 = smul.u32 %s385, 7
          %p387 = scmp.lt.s32.totalorder %s381, 4
          %s388 = scalar_select %p387, %s381, 4
          %s389 = smul.addr %s388, 7
          %s390 = smul.addr %s389, 8
          %s391 = scalar_lea.vmem %s0, %s390
          %s392 = smul.u32 4, %s19
          %s393 = ssub.s32 5, %s392
          %p394 = scmp.lt.s32.totalorder %s393, 4
          %s395 = scalar_select %p394, %s393, 4
          %s396 = smul.u32 8, %s395
          %s397 = smul.u32 %s396, 7
        $region68: #{mlp_forward.1} parent=63 // pred_fallthru
          _
      $region64: #{mlp_forward.1} parent=5 // pred_fallthru
        _
      %p398 = scmp.le.s32.totalorder 1, %s19
      %p399 = scmp.lt.s32.totalorder %s19, 3
      %p400 = pnand %p398, %p399
      %p401 = pneg %p400
      // Predicated region
      $region69: #{mlp_forward.1} parent=5 // pred_check
        _
      $region70: #{mlp_forward.1} parent=5 // pred_check_branch
        %403 = sbr.rel (%p400) target = $region72
      $region71: #{mlp_forward.1} parent=5 // pred_region
        %s404 = ssub.s32 %s19, 1
        %s405 = smul.u32 4, %s24
        %s406 = ssub.s32 5, %s405
        %p407 = scmp.lt.s32.totalorder %s406, 4
        %s408 = scalar_select %p407, %s406, 4
        %s409 = smul.u32 8, %s408
        %s410 = smul.u32 %s409, 7
        %p411 = scmp.lt.s32.totalorder %s405, 4
        %s412 = scalar_select %p411, %s405, 4
        %s413 = smul.addr %s412, 7
        %s414 = smul.addr %s413, 8
        %s415 = scalar_lea.vmem %s0, %s414
        %p416 = pneg %p45
        %p417 = pneg %p42
        %p418 = pneg %p66
        %p419 = pneg %p63
        %p420 = pneg %p87
        %p421 = pneg %p84
        %p422 = pneg %p108
        %p423 = pneg %p105
        %p424 = pneg %p129
        %p425 = pneg %p126
        %p426 = pneg %p150
        %p427 = pneg %p147
        %p428 = pneg %p171
        %p429 = pneg %p168
        %p430 = pneg %p192
        %p431 = pneg %p189
        %p432 = pneg %p213
        %p433 = pneg %p210
        %p434 = pneg %p234
        %p435 = pneg %p231
        %p436 = pneg %p255
        %p437 = pneg %p252
        %p438 = pneg %p276
        %p439 = pneg %p273
        %p440 = pneg %p297
        %p441 = pneg %p294
        %p442 = pneg %p323
        %p443 = pneg %p320
        %s444 = sand.u32 %s310, 1
        %s445 = sand.u32 %s310, 1
        %s446 = smul.addr %s445, 32
        %s447 = scalar_lea.vmem [#allocation2], %s446
        %s448 = smul.u32 4, %s24
        %s449 = ssub.s32 5, %s448
        %p450 = scmp.lt.s32.totalorder %s449, 4
        %s451 = scalar_select %p450, %s449, 4
        %s452 = smul.u32 8, %s451
        %s453 = smul.u32 %s452, 7
        %p454 = scmp.lt.s32.totalorder %s448, 4
        %s455 = scalar_select %p454, %s448, 4
        %s456 = smul.addr %s455, 7
        %s457 = smul.addr %s456, 8
        %s458 = scalar_lea.vmem %s0, %s457
        %s459 = smul.u32 4, %s24
        %s460 = ssub.s32 5, %s459
        %p461 = scmp.lt.s32.totalorder %s460, 4
        %s462 = scalar_select %p461, %s460, 4
        %s463 = smul.u32 8, %s462
        %s464 = smul.u32 %s463, 7
        %s465 = smul.u32 4, %s24
        %s466 = ssub.s32 5, %s465
        %p467 = scmp.lt.s32.totalorder %s466, 4
        %s468 = scalar_select %p467, %s466, 4
        %s469 = smul.u32 8, %s468
        %v471 = vld [vmem:[%s458] sm:$0xff]
        %v472 = vld [vmem:[%s458 + $0x8] sm:$0xff]
        %v473 = vld [vmem:[%s458 + $0x10] sm:$0xff]
        %v474 = vld [vmem:[%s458 + $0x18] sm:$0xff]
        %v475 = vld [vmem:[%s458 + $0x20] sm:$0xff]
        %v476 = vld [vmem:[%s458 + $0x28] sm:$0xff]
        %v477 = vld [vmem:[%s458 + $0x30] sm:$0xff]
        %v478 = vld [vmem:[%s458 + $0x38] sm:$0xff]
        %v479 = vld [vmem:[%s458 + $0x40] sm:$0xff]
        %v480 = vld [vmem:[%s458 + $0x48] sm:$0xff]
        %v481 = vld [vmem:[%s458 + $0x50] sm:$0xff]
        %v482 = vld [vmem:[%s458 + $0x58] sm:$0xff]
        %v483 = vld [vmem:[%s458 + $0x60] sm:$0xff]
        %v484 = vld [vmem:[%s458 + $0x68] sm:$0xff]
        %v485 = vld [vmem:[%s458 + $0x70] sm:$0xff]
        %v486 = vld [vmem:[%s458 + $0x78] sm:$0xff]
        %v487 = vld [vmem:[%s458 + $0x80] sm:$0xff]
        %v488 = vld [vmem:[%s458 + $0x88] sm:$0xff]
        %v489 = vld [vmem:[%s458 + $0x90] sm:$0xff]
        %v490 = vld [vmem:[%s458 + $0x98] sm:$0xff]
        %v491 = vld [vmem:[%s458 + $0xa0] sm:$0xff]
        %v492 = vld [vmem:[%s458 + $0xa8] sm:$0xff]
        %v493 = vld [vmem:[%s458 + $0xb0] sm:$0xff]
        %v494 = vld [vmem:[%s458 + $0xb8] sm:$0xff]
        %v495 = vld [vmem:[%s458 + $0xc0] sm:$0xff]
        %v496 = vld [vmem:[%s458 + $0xc8] sm:$0xff]
        %v497 = vld [vmem:[%s458 + $0xd0] sm:$0xff]
        %v498 = vld [vmem:[%s458 + $0xd8] sm:$0xff]
        %v499 = vpack.c.bf16 %v478, %v471
        %v500 = vpack.c.bf16 %v479, %v472
        %v501 = vpack.c.bf16 %v480, %v473
        %v502 = vpack.c.bf16 %v481, %v474
        %v503 = vpack.c.bf16 %v482, %v475
        %v504 = vpack.c.bf16 %v483, %v476
        %v505 = vpack.c.bf16 %v484, %v477
        %v506 = vpack.c.bf16 %v492, %v485
        %v507 = vpack.c.bf16 %v493, %v486
        %v508 = vpack.c.bf16 %v494, %v487
        %v509 = vpack.c.bf16 %v495, %v488
        %v510 = vpack.c.bf16 %v496, %v489
        %v511 = vpack.c.bf16 %v497, %v490
        %v512 = vpack.c.bf16 %v498, %v491
        %v513 = vld [vmem:[%s1] sm:$0xff]
        %v514 = vld [vmem:[%s1 + $0x8] sm:$0xff]
        %v515 = vld [vmem:[%s1 + $0x10] sm:$0xff]
        %v516 = vld [vmem:[%s1 + $0x18] sm:$0xff]
        %v517 = vld [vmem:[%s1 + $0x20] sm:$0xff]
        %v518 = vld [vmem:[%s1 + $0x28] sm:$0xff]
        %v519 = vld [vmem:[%s1 + $0x30] sm:$0xff]
        %v520 = vld [vmem:[%s1 + $0x38] sm:$0xff]
        %v521 = vld [vmem:[%s1 + $0x40] sm:$0xff]
        %v522 = vld [vmem:[%s1 + $0x48] sm:$0xff]
        %v523 = vld [vmem:[%s1 + $0x50] sm:$0xff]
        %v524 = vld [vmem:[%s1 + $0x58] sm:$0xff]
        %v525 = vld [vmem:[%s1 + $0x60] sm:$0xff]
        %v526 = vld [vmem:[%s1 + $0x68] sm:$0xff]
        %v527 = vld [vmem:[%s1 + $0x70] sm:$0xff]
        %v528 = vld [vmem:[%s1 + $0x78] sm:$0xff]
        %v529 = vld [vmem:[%s1 + $0x80] sm:$0xff]
        %v530 = vld [vmem:[%s1 + $0x88] sm:$0xff]
        %v531 = vld [vmem:[%s1 + $0x90] sm:$0xff]
        %v532 = vld [vmem:[%s1 + $0x98] sm:$0xff]
        %v533 = vld [vmem:[%s1 + $0xa0] sm:$0xff]
        %v534 = vld [vmem:[%s1 + $0xa8] sm:$0xff]
        %v535 = vld [vmem:[%s1 + $0xb0] sm:$0xff]
        %v536 = vld [vmem:[%s1 + $0xb8] sm:$0xff]
        %v537 = vld [vmem:[%s1 + $0xc0] sm:$0xff]
        %v538 = vld [vmem:[%s1 + $0xc8] sm:$0xff]
        %v539 = vld [vmem:[%s1 + $0xd0] sm:$0xff]
        %v540 = vld [vmem:[%s1 + $0xd8] sm:$0xff]
        %v541 = vld [vmem:[%s1 + $0xe0] sm:$0xff]
        %v542 = vld [vmem:[%s1 + $0xe8] sm:$0xff]
        %v543 = vld [vmem:[%s1 + $0xf0] sm:$0xff]
        %v544 = vld [vmem:[%s1 + $0xf8] sm:$0xff]
        %v545 = vld [vmem:[%s1 + $0x100] sm:$0xff]
        %v546 = vld [vmem:[%s1 + $0x108] sm:$0xff]
        %v547 = vld [vmem:[%s1 + $0x110] sm:$0xff]
        %v548 = vld [vmem:[%s1 + $0x118] sm:$0xff]
        %v549 = vld [vmem:[%s1 + $0x120] sm:$0xff]
        %v550 = vld [vmem:[%s1 + $0x128] sm:$0xff]
        %v551 = vld [vmem:[%s1 + $0x130] sm:$0xff]
        %v552 = vld [vmem:[%s1 + $0x138] sm:$0xff]
        %v553 = vld [vmem:[%s1 + $0x140] sm:$0xff]
        %v554 = vld [vmem:[%s1 + $0x148] sm:$0xff]
        %v555 = vld [vmem:[%s1 + $0x150] sm:$0xff]
        %v556 = vld [vmem:[%s1 + $0x158] sm:$0xff]
        %v557 = vld [vmem:[%s1 + $0x160] sm:$0xff]
        %v558 = vld [vmem:[%s1 + $0x168] sm:$0xff]
        %v559 = vld [vmem:[%s1 + $0x170] sm:$0xff]
        %v560 = vld [vmem:[%s1 + $0x178] sm:$0xff]
        %v561 = vld [vmem:[%s1 + $0x180] sm:$0xff]
        %v562 = vld [vmem:[%s1 + $0x188] sm:$0xff]
        %v563 = vld [vmem:[%s1 + $0x190] sm:$0xff]
        %v564 = vld [vmem:[%s1 + $0x198] sm:$0xff]
        %v565 = vld [vmem:[%s1 + $0x1a0] sm:$0xff]
        %v566 = vld [vmem:[%s1 + $0x1a8] sm:$0xff]
        %v567 = vld [vmem:[%s1 + $0x1b0] sm:$0xff]
        %v568 = vld [vmem:[%s1 + $0x1b8] sm:$0xff]
        %v569 = vld [vmem:[%s1 + $0x1c0] sm:$0xff]
        %v570 = vld [vmem:[%s1 + $0x1c8] sm:$0xff]
        %v571 = vld [vmem:[%s1 + $0x1d0] sm:$0xff]
        %v572 = vld [vmem:[%s1 + $0x1d8] sm:$0xff]
        %v573 = vld [vmem:[%s1 + $0x1e0] sm:$0xff]
        %v574 = vld [vmem:[%s1 + $0x1e8] sm:$0xff]
        %v575 = vld [vmem:[%s1 + $0x1f0] sm:$0xff]
        %v576 = vld [vmem:[%s1 + $0x1f8] sm:$0xff]
        %v577 = vld [vmem:[%s1 + $0x200] sm:$0xff]
        %v578 = vld [vmem:[%s1 + $0x208] sm:$0xff]
        %v579 = vld [vmem:[%s1 + $0x210] sm:$0xff]
        %v580 = vld [vmem:[%s1 + $0x218] sm:$0xff]
        %v581 = vld [vmem:[%s1 + $0x220] sm:$0xff]
        %v582 = vld [vmem:[%s1 + $0x228] sm:$0xff]
        %v583 = vld [vmem:[%s1 + $0x230] sm:$0xff]
        %v584 = vld [vmem:[%s1 + $0x238] sm:$0xff]
        %v585 = vld [vmem:[%s1 + $0x240] sm:$0xff]
        %v586 = vld [vmem:[%s1 + $0x248] sm:$0xff]
        %v587 = vld [vmem:[%s1 + $0x250] sm:$0xff]
        %v588 = vld [vmem:[%s1 + $0x258] sm:$0xff]
        %v589 = vld [vmem:[%s1 + $0x260] sm:$0xff]
        %v590 = vld [vmem:[%s1 + $0x268] sm:$0xff]
        %v591 = vld [vmem:[%s1 + $0x270] sm:$0xff]
        %v592 = vld [vmem:[%s1 + $0x278] sm:$0xff]
        %v593 = vld [vmem:[%s1 + $0x280] sm:$0xff]
        %v594 = vld [vmem:[%s1 + $0x288] sm:$0xff]
        %v595 = vld [vmem:[%s1 + $0x290] sm:$0xff]
        %v596 = vld [vmem:[%s1 + $0x298] sm:$0xff]
        %v597 = vld [vmem:[%s1 + $0x2a0] sm:$0xff]
        %v598 = vld [vmem:[%s1 + $0x2a8] sm:$0xff]
        %v599 = vld [vmem:[%s1 + $0x2b0] sm:$0xff]
        %v600 = vld [vmem:[%s1 + $0x2b8] sm:$0xff]
        %v601 = vld [vmem:[%s1 + $0x2c0] sm:$0xff]
        %v602 = vld [vmem:[%s1 + $0x2c8] sm:$0xff]
        %v603 = vld [vmem:[%s1 + $0x2d0] sm:$0xff]
        %v604 = vld [vmem:[%s1 + $0x2d8] sm:$0xff]
        %v605 = vld [vmem:[%s1 + $0x2e0] sm:$0xff]
        %v606 = vld [vmem:[%s1 + $0x2e8] sm:$0xff]
        %v607 = vld [vmem:[%s1 + $0x2f0] sm:$0xff]
        %v608 = vld [vmem:[%s1 + $0x2f8] sm:$0xff]
        %v609 = vld [vmem:[%s1 + $0x300] sm:$0xff]
        %v610 = vld [vmem:[%s1 + $0x308] sm:$0xff]
        %v611 = vld [vmem:[%s2] sm:$0x3]
        %v613 = vperm.slane %v611, 0
        %v614 = vperm.slane %v611, 1
        %v715 = vunpack.c.l.b16 %v513
        %v716 = vunpack.c.h.b16 %v513
        %v717 = vunpack.c.l.b16 %v514
        %v718 = vunpack.c.h.b16 %v514
        %v719 = vunpack.c.l.b16 %v515
        %v720 = vunpack.c.h.b16 %v515
        %v721 = vunpack.c.l.b16 %v516
        %v722 = vunpack.c.h.b16 %v516
        %v723 = vunpack.c.l.b16 %v517
        %v724 = vunpack.c.h.b16 %v517
        %v725 = vunpack.c.l.b16 %v518
        %v726 = vunpack.c.h.b16 %v518
        %v727 = vunpack.c.l.b16 %v519
        %v728 = vunpack.c.h.b16 %v519
        %v729 = vunpack.c.l.b16 %v520
        %v730 = vunpack.c.h.b16 %v520
        %v731 = vunpack.c.l.b16 %v521
        %v732 = vunpack.c.h.b16 %v521
        %v733 = vunpack.c.l.b16 %v522
        %v734 = vunpack.c.h.b16 %v522
        %v735 = vunpack.c.l.b16 %v523
        %v736 = vunpack.c.h.b16 %v523
        %v737 = vunpack.c.l.b16 %v524
        %v738 = vunpack.c.h.b16 %v524
        %v739 = vunpack.c.l.b16 %v525
        %v740 = vunpack.c.h.b16 %v525
        %v741 = vunpack.c.l.b16 %v526
        %v742 = vunpack.c.h.b16 %v526
        %v743 = vunpack.c.l.b16 %v527
        %v744 = vunpack.c.h.b16 %v527
        %v745 = vunpack.c.l.b16 %v528
        %v746 = vunpack.c.h.b16 %v528
        %v747 = vunpack.c.l.b16 %v529
        %v748 = vunpack.c.h.b16 %v529
        %v749 = vunpack.c.l.b16 %v530
        %v750 = vunpack.c.h.b16 %v530
        %v751 = vunpack.c.l.b16 %v531
        %v752 = vunpack.c.h.b16 %v531
        %v753 = vunpack.c.l.b16 %v532
        %v754 = vunpack.c.h.b16 %v532
        %v755 = vunpack.c.l.b16 %v533
        %v756 = vunpack.c.h.b16 %v533
        %v757 = vunpack.c.l.b16 %v534
        %v758 = vunpack.c.h.b16 %v534
        %v759 = vunpack.c.l.b16 %v535
        %v760 = vunpack.c.h.b16 %v535
        %v761 = vunpack.c.l.b16 %v536
        %v762 = vunpack.c.h.b16 %v536
        %v763 = vunpack.c.l.b16 %v537
        %v764 = vunpack.c.h.b16 %v537
        %v765 = vunpack.c.l.b16 %v538
        %v766 = vunpack.c.h.b16 %v538
        %v767 = vunpack.c.l.b16 %v539
        %v768 = vunpack.c.h.b16 %v539
        %v769 = vunpack.c.l.b16 %v540
        %v770 = vunpack.c.h.b16 %v540
        %v771 = vunpack.c.l.b16 %v541
        %v772 = vunpack.c.h.b16 %v541
        %v773 = vunpack.c.l.b16 %v542
        %v774 = vunpack.c.h.b16 %v542
        %v775 = vunpack.c.l.b16 %v543
        %v776 = vunpack.c.h.b16 %v543
        %v777 = vunpack.c.l.b16 %v544
        %v778 = vunpack.c.h.b16 %v544
        %v779 = vunpack.c.l.b16 %v545
        %v780 = vunpack.c.h.b16 %v545
        %v781 = vunpack.c.l.b16 %v546
        %v782 = vunpack.c.h.b16 %v546
        %v783 = vunpack.c.l.b16 %v547
        %v784 = vunpack.c.h.b16 %v547
        %v785 = vunpack.c.l.b16 %v548
        %v786 = vunpack.c.h.b16 %v548
        %v787 = vunpack.c.l.b16 %v549
        %v788 = vunpack.c.h.b16 %v549
        %v789 = vunpack.c.l.b16 %v550
        %v790 = vunpack.c.h.b16 %v550
        %v791 = vunpack.c.l.b16 %v551
        %v792 = vunpack.c.h.b16 %v551
        %v793 = vunpack.c.l.b16 %v552
        %v794 = vunpack.c.h.b16 %v552
        %v795 = vunpack.c.l.b16 %v553
        %v796 = vunpack.c.h.b16 %v553
        %v797 = vunpack.c.l.b16 %v554
        %v798 = vunpack.c.h.b16 %v554
        %v799 = vunpack.c.l.b16 %v555
        %v800 = vunpack.c.h.b16 %v555
        %v801 = vunpack.c.l.b16 %v556
        %v802 = vunpack.c.h.b16 %v556
        %v803 = vunpack.c.l.b16 %v557
        %v804 = vunpack.c.h.b16 %v557
        %v805 = vunpack.c.l.b16 %v558
        %v806 = vunpack.c.h.b16 %v558
        %v807 = vunpack.c.l.b16 %v559
        %v808 = vunpack.c.h.b16 %v559
        %v809 = vunpack.c.l.b16 %v560
        %v810 = vunpack.c.h.b16 %v560
        %v811 = vunpack.c.l.b16 %v561
        %v812 = vunpack.c.h.b16 %v561
        %v813 = vunpack.c.l.b16 %v562
        %v814 = vunpack.c.h.b16 %v562
        %v815 = vunpack.c.l.b16 %v563
        %v816 = vunpack.c.h.b16 %v563
        %v817 = vunpack.c.l.b16 %v564
        %v818 = vunpack.c.h.b16 %v564
        %v819 = vunpack.c.l.b16 %v565
        %v820 = vunpack.c.h.b16 %v565
        %v821 = vunpack.c.l.b16 %v566
        %v822 = vunpack.c.h.b16 %v566
        %v823 = vunpack.c.l.b16 %v567
        %v824 = vunpack.c.h.b16 %v567
        %v825 = vunpack.c.l.b16 %v568
        %v826 = vunpack.c.h.b16 %v568
        %v827 = vunpack.c.l.b16 %v569
        %v828 = vunpack.c.h.b16 %v569
        %v829 = vunpack.c.l.b16 %v570
        %v830 = vunpack.c.h.b16 %v570
        %v831 = vunpack.c.l.b16 %v571
        %v832 = vunpack.c.h.b16 %v571
        %v833 = vunpack.c.l.b16 %v572
        %v834 = vunpack.c.h.b16 %v572
        %v835 = vunpack.c.l.b16 %v573
        %v836 = vunpack.c.h.b16 %v573
        %v837 = vunpack.c.l.b16 %v574
        %v838 = vunpack.c.h.b16 %v574
        %v839 = vunpack.c.l.b16 %v575
        %v840 = vunpack.c.h.b16 %v575
        %v841 = vunpack.c.l.b16 %v576
        %v842 = vunpack.c.h.b16 %v576
        %v843 = vunpack.c.l.b16 %v577
        %v844 = vunpack.c.h.b16 %v577
        %v845 = vunpack.c.l.b16 %v578
        %v846 = vunpack.c.h.b16 %v578
        %v847 = vunpack.c.l.b16 %v579
        %v848 = vunpack.c.h.b16 %v579
        %v849 = vunpack.c.l.b16 %v580
        %v850 = vunpack.c.h.b16 %v580
        %v851 = vunpack.c.l.b16 %v581
        %v852 = vunpack.c.h.b16 %v581
        %v853 = vunpack.c.l.b16 %v582
        %v854 = vunpack.c.h.b16 %v582
        %v855 = vunpack.c.l.b16 %v583
        %v856 = vunpack.c.h.b16 %v583
        %v857 = vunpack.c.l.b16 %v584
        %v858 = vunpack.c.h.b16 %v584
        %v859 = vunpack.c.l.b16 %v585
        %v860 = vunpack.c.h.b16 %v585
        %v861 = vunpack.c.l.b16 %v586
        %v862 = vunpack.c.h.b16 %v586
        %v863 = vunpack.c.l.b16 %v587
        %v864 = vunpack.c.h.b16 %v587
        %v865 = vunpack.c.l.b16 %v588
        %v866 = vunpack.c.h.b16 %v588
        %v867 = vunpack.c.l.b16 %v589
        %v868 = vunpack.c.h.b16 %v589
        %v869 = vunpack.c.l.b16 %v590
        %v870 = vunpack.c.h.b16 %v590
        %v871 = vunpack.c.l.b16 %v591
        %v872 = vunpack.c.h.b16 %v591
        %v873 = vunpack.c.l.b16 %v592
        %v874 = vunpack.c.h.b16 %v592
        %v875 = vunpack.c.l.b16 %v593
        %v876 = vunpack.c.h.b16 %v593
        %v877 = vunpack.c.l.b16 %v594
        %v878 = vunpack.c.h.b16 %v594
        %v879 = vunpack.c.l.b16 %v595
        %v880 = vunpack.c.h.b16 %v595
        %v881 = vunpack.c.l.b16 %v596
        %v882 = vunpack.c.h.b16 %v596
        %v883 = vunpack.c.l.b16 %v597
        %v884 = vunpack.c.h.b16 %v597
        %v885 = vunpack.c.l.b16 %v598
        %v886 = vunpack.c.h.b16 %v598
        %v887 = vunpack.c.l.b16 %v599
        %v888 = vunpack.c.h.b16 %v599
        %v889 = vunpack.c.l.b16 %v600
        %v890 = vunpack.c.h.b16 %v600
        %v891 = vunpack.c.l.b16 %v601
        %v892 = vunpack.c.h.b16 %v601
        %v893 = vunpack.c.l.b16 %v602
        %v894 = vunpack.c.h.b16 %v602
        %v895 = vunpack.c.l.b16 %v603
        %v896 = vunpack.c.h.b16 %v603
        %v897 = vunpack.c.l.b16 %v604
        %v898 = vunpack.c.h.b16 %v604
        %v899 = vunpack.c.l.b16 %v605
        %v900 = vunpack.c.h.b16 %v605
        %v901 = vunpack.c.l.b16 %v606
        %v902 = vunpack.c.h.b16 %v606
        %v903 = vunpack.c.l.b16 %v607
        %v904 = vunpack.c.h.b16 %v607
        %v905 = vunpack.c.l.b16 %v608
        %v906 = vunpack.c.h.b16 %v608
        %v907 = vunpack.c.l.b16 %v609
        %v908 = vunpack.c.h.b16 %v609
        %v909 = vunpack.c.l.b16 %v610
        %v910 = vunpack.c.h.b16 %v610
        %v911 = vpack.c.b16 %v717, %v715
        %v912 = vpack.c.b16 %v718, %v716
        %v913 = vpack.c.b16 %v721, %v719
        %v914 = vpack.c.b16 %v722, %v720
        %v915 = vpack.c.b16 %v725, %v723
        %v916 = vpack.c.b16 %v726, %v724
        %v917 = vpack.c.b16 %v729, %v727
        %v918 = vpack.c.b16 %v730, %v728
        %v919 = vpack.c.b16 %v733, %v731
        %v920 = vpack.c.b16 %v734, %v732
        %v921 = vpack.c.b16 %v737, %v735
        %v922 = vpack.c.b16 %v738, %v736
        %v923 = vpack.c.b16 %v741, %v739
        %v924 = vpack.c.b16 %v742, %v740
        %v925 = vpack.c.b16 %v745, %v743
        %v926 = vpack.c.b16 %v746, %v744
        %v927 = vpack.c.b16 %v749, %v747
        %v928 = vpack.c.b16 %v750, %v748
        %v929 = vpack.c.b16 %v753, %v751
        %v930 = vpack.c.b16 %v754, %v752
        %v931 = vpack.c.b16 %v757, %v755
        %v932 = vpack.c.b16 %v758, %v756
        %v933 = vpack.c.b16 %v761, %v759
        %v934 = vpack.c.b16 %v762, %v760
        %v935 = vpack.c.b16 %v765, %v763
        %v936 = vpack.c.b16 %v766, %v764
        %v937 = vpack.c.b16 %v769, %v767
        %v938 = vpack.c.b16 %v770, %v768
        %v939 = vpack.c.b16 %v773, %v771
        %v940 = vpack.c.b16 %v774, %v772
        %v941 = vpack.c.b16 %v777, %v775
        %v942 = vpack.c.b16 %v778, %v776
        %v943 = vpack.c.b16 %v781, %v779
        %v944 = vpack.c.b16 %v782, %v780
        %v945 = vpack.c.b16 %v785, %v783
        %v946 = vpack.c.b16 %v786, %v784
        %v947 = vpack.c.b16 %v789, %v787
        %v948 = vpack.c.b16 %v790, %v788
        %v949 = vpack.c.b16 %v793, %v791
        %v950 = vpack.c.b16 %v794, %v792
        %v951 = vpack.c.b16 %v797, %v795
        %v952 = vpack.c.b16 %v798, %v796
        %v953 = vpack.c.b16 %v801, %v799
        %v954 = vpack.c.b16 %v802, %v800
        %v955 = vpack.c.b16 %v805, %v803
        %v956 = vpack.c.b16 %v806, %v804
        %v957 = vpack.c.b16 %v809, %v807
        %v958 = vpack.c.b16 %v810, %v808
        %v959 = vpack.c.b16 %v813, %v811
        %v960 = vpack.c.b16 %v814, %v812
        %v961 = vpack.c.b16 %v817, %v815
        %v962 = vpack.c.b16 %v818, %v816
        %v963 = vpack.c.b16 %v821, %v819
        %v964 = vpack.c.b16 %v822, %v820
        %v965 = vpack.c.b16 %v825, %v823
        %v966 = vpack.c.b16 %v826, %v824
        %v967 = vpack.c.b16 %v829, %v827
        %v968 = vpack.c.b16 %v830, %v828
        %v969 = vpack.c.b16 %v833, %v831
        %v970 = vpack.c.b16 %v834, %v832
        %v971 = vpack.c.b16 %v837, %v835
        %v972 = vpack.c.b16 %v838, %v836
        %v973 = vpack.c.b16 %v841, %v839
        %v974 = vpack.c.b16 %v842, %v840
        %v975 = vpack.c.b16 %v845, %v843
        %v976 = vpack.c.b16 %v846, %v844
        %v977 = vpack.c.b16 %v849, %v847
        %v978 = vpack.c.b16 %v850, %v848
        %v979 = vpack.c.b16 %v853, %v851
        %v980 = vpack.c.b16 %v854, %v852
        %v981 = vpack.c.b16 %v857, %v855
        %v982 = vpack.c.b16 %v858, %v856
        %v983 = vpack.c.b16 %v861, %v859
        %v984 = vpack.c.b16 %v862, %v860
        %v985 = vpack.c.b16 %v865, %v863
        %v986 = vpack.c.b16 %v866, %v864
        %v987 = vpack.c.b16 %v869, %v867
        %v988 = vpack.c.b16 %v870, %v868
        %v989 = vpack.c.b16 %v873, %v871
        %v990 = vpack.c.b16 %v874, %v872
        %v991 = vpack.c.b16 %v877, %v875
        %v992 = vpack.c.b16 %v878, %v876
        %v993 = vpack.c.b16 %v881, %v879
        %v994 = vpack.c.b16 %v882, %v880
        %v995 = vpack.c.b16 %v885, %v883
        %v996 = vpack.c.b16 %v886, %v884
        %v997 = vpack.c.b16 %v889, %v887
        %v998 = vpack.c.b16 %v890, %v888
        %v999 = vpack.c.b16 %v893, %v891
        %v1000 = vpack.c.b16 %v894, %v892
        %v1001 = vpack.c.b16 %v897, %v895
        %v1002 = vpack.c.b16 %v898, %v896
        %v1003 = vpack.c.b16 %v901, %v899
        %v1004 = vpack.c.b16 %v902, %v900
        %v1005 = vpack.c.b16 %v905, %v903
        %v1006 = vpack.c.b16 %v906, %v904
        %v1007 = vpack.c.b16 %v909, %v907
        %v1008 = vpack.c.b16 %v910, %v908
        %vm1107 = vcmask 130048
        %v1109 = vsel %vm1107, %v505, 0
        %v1112 = vsel %vm1107, %v512, 0
        %1114 = vmatpush.bf16.msra.mxu0 %v925
        %1115 = vmatpush.bf16.msra.mxu0 %v923
        %1116 = vmatpush.bf16.msra.mxu0 %v921
        %1117 = vmatpush.bf16.msra.mxu0 %v919
        %1118 = vmatpush.bf16.msra.mxu0 %v917
        %1119 = vmatpush.bf16.msra.mxu0 %v915
        %1120 = vmatpush.bf16.msra.mxu0 %v913
        %1121 = vmatpush.bf16.msra.mxu0 %v911
        %1122 = vmatmul.bf16.gmra.mxu0 %v499
        %v1123 = vpop.f32.mrf.mxu0
        %v1124 = vadd.f32 %v613, %v1123
        %v1125 = vpop.f32.mrf.mxu0
        %v1126 = vadd.f32 %v613, %v1125
        %1127 = vmatmul.bf16.gmra.mxu0 %v506
        %v1128 = vpop.f32.mrf.mxu0
        %v1129 = vadd.f32 %v613, %v1128
        %v1130 = vpop.f32.mrf.mxu0
        %v1131 = vadd.f32 %v613, %v1130
        %1132 = vdwg.mxu0
        %1133 = vmatpush.bf16.msra.mxu0 %v941
        %1134 = vmatpush.bf16.msra.mxu0 %v939
        %1135 = vmatpush.bf16.msra.mxu0 %v937
        %1136 = vmatpush.bf16.msra.mxu0 %v935
        %1137 = vmatpush.bf16.msra.mxu0 %v933
        %1138 = vmatpush.bf16.msra.mxu0 %v931
        %1139 = vmatpush.bf16.msra.mxu0 %v929
        %1140 = vmatpush.bf16.msra.mxu0 %v927
        %1141 = vmatmul.bf16.gmra.mxu0 %v500
        %v1142 = vpop.f32.mrf.mxu0
        %v1143 = vadd.f32 %v1124, %v1142
        %v1144 = vpop.f32.mrf.mxu0
        %v1145 = vadd.f32 %v1126, %v1144
        %1146 = vmatmul.bf16.gmra.mxu0 %v507
        %v1147 = vpop.f32.mrf.mxu0
        %v1148 = vadd.f32 %v1129, %v1147
        %v1149 = vpop.f32.mrf.mxu0
        %v1150 = vadd.f32 %v1131, %v1149
        %1151 = vdwg.mxu0
        %1152 = vmatpush.bf16.msra.mxu0 %v957
        %1153 = vmatpush.bf16.msra.mxu0 %v955
        %1154 = vmatpush.bf16.msra.mxu0 %v953
        %1155 = vmatpush.bf16.msra.mxu0 %v951
        %1156 = vmatpush.bf16.msra.mxu0 %v949
        %1157 = vmatpush.bf16.msra.mxu0 %v947
        %1158 = vmatpush.bf16.msra.mxu0 %v945
        %1159 = vmatpush.bf16.msra.mxu0 %v943
        %1160 = vmatmul.bf16.gmra.mxu0 %v501
        %v1161 = vpop.f32.mrf.mxu0
        %v1162 = vadd.f32 %v1143, %v1161
        %v1163 = vpop.f32.mrf.mxu0
        %v1164 = vadd.f32 %v1145, %v1163
        %1165 = vmatmul.bf16.gmra.mxu0 %v508
        %v1166 = vpop.f32.mrf.mxu0
        %v1167 = vadd.f32 %v1148, %v1166
        %v1168 = vpop.f32.mrf.mxu0
        %v1169 = vadd.f32 %v1150, %v1168
        %1170 = vdwg.mxu0
        %1171 = vmatpush.bf16.msra.mxu0 %v973
        %1172 = vmatpush.bf16.msra.mxu0 %v971
        %1173 = vmatpush.bf16.msra.mxu0 %v969
        %1174 = vmatpush.bf16.msra.mxu0 %v967
        %1175 = vmatpush.bf16.msra.mxu0 %v965
        %1176 = vmatpush.bf16.msra.mxu0 %v963
        %1177 = vmatpush.bf16.msra.mxu0 %v961
        %1178 = vmatpush.bf16.msra.mxu0 %v959
        %1179 = vmatmul.bf16.gmra.mxu0 %v502
        %v1180 = vpop.f32.mrf.mxu0
        %v1181 = vadd.f32 %v1162, %v1180
        %v1182 = vpop.f32.mrf.mxu0
        %v1183 = vadd.f32 %v1164, %v1182
        %1184 = vmatmul.bf16.gmra.mxu0 %v509
        %v1185 = vpop.f32.mrf.mxu0
        %v1186 = vadd.f32 %v1167, %v1185
        %v1187 = vpop.f32.mrf.mxu0
        %v1188 = vadd.f32 %v1169, %v1187
        %1189 = vdwg.mxu0
        %1190 = vmatpush.bf16.msra.mxu0 %v989
        %1191 = vmatpush.bf16.msra.mxu0 %v987
        %1192 = vmatpush.bf16.msra.mxu0 %v985
        %1193 = vmatpush.bf16.msra.mxu0 %v983
        %1194 = vmatpush.bf16.msra.mxu0 %v981
        %1195 = vmatpush.bf16.msra.mxu0 %v979
        %1196 = vmatpush.bf16.msra.mxu0 %v977
        %1197 = vmatpush.bf16.msra.mxu0 %v975
        %1198 = vmatmul.bf16.gmra.mxu0 %v503
        %v1199 = vpop.f32.mrf.mxu0
        %v1200 = vadd.f32 %v1181, %v1199
        %v1201 = vpop.f32.mrf.mxu0
        %v1202 = vadd.f32 %v1183, %v1201
        %1203 = vmatmul.bf16.gmra.mxu0 %v510
        %v1204 = vpop.f32.mrf.mxu0
        %v1205 = vadd.f32 %v1186, %v1204
        %v1206 = vpop.f32.mrf.mxu0
        %v1207 = vadd.f32 %v1188, %v1206
        %1208 = vdwg.mxu0
        %1209 = vmatpush.bf16.msra.mxu0 %v1005
        %1210 = vmatpush.bf16.msra.mxu0 %v1003
        %1211 = vmatpush.bf16.msra.mxu0 %v1001
        %1212 = vmatpush.bf16.msra.mxu0 %v999
        %1213 = vmatpush.bf16.msra.mxu0 %v997
        %1214 = vmatpush.bf16.msra.mxu0 %v995
        %1215 = vmatpush.bf16.msra.mxu0 %v993
        %1216 = vmatpush.bf16.msra.mxu0 %v991
        %1217 = vmatmul.bf16.gmra.mxu0 %v504
        %v1218 = vpop.f32.mrf.mxu0
        %v1219 = vadd.f32 %v1200, %v1218
        %v1220 = vpop.f32.mrf.mxu0
        %v1221 = vadd.f32 %v1202, %v1220
        %1222 = vmatmul.bf16.gmra.mxu0 %v511
        %v1223 = vpop.f32.mrf.mxu0
        %v1224 = vadd.f32 %v1205, %v1223
        %v1225 = vpop.f32.mrf.mxu0
        %v1226 = vadd.f32 %v1207, %v1225
        %1227 = vdwg.mxu0
        %1228 = vmatpush.bf16.msra.mxu0 0
        %1229 = vmatpush.bf16.msra.mxu0 0
        %1230 = vmatpush.bf16.msra.mxu0 0
        %1231 = vmatpush.bf16.msra.mxu0 0
        %1232 = vmatpush.bf16.msra.mxu0 0
        %1233 = vmatpush.bf16.msra.mxu0 0
        %1234 = vmatpush.bf16.msra.mxu0 0
        %1235 = vmatpush.bf16.msra.mxu0 %v1007
        %1236 = vmatmul.bf16.gmra.mxu0 %v1109
        %v1237 = vpop.f32.mrf.mxu0
        %v1238 = vadd.f32 %v1219, %v1237
        %v1239 = vpop.f32.mrf.mxu0
        %v1240 = vadd.f32 %v1221, %v1239
        %1241 = vmatmul.bf16.gmra.mxu0 %v1112
        %v1242 = vpop.f32.mrf.mxu0
        %v1243 = vadd.f32 %v1224, %v1242
        %v1244 = vpop.f32.mrf.mxu0
        %v1245 = vadd.f32 %v1226, %v1244
        %1246 = vdwg.mxu0
        %1247 = vmatpush.bf16.msra.mxu0 %v926
        %1248 = vmatpush.bf16.msra.mxu0 %v924
        %1249 = vmatpush.bf16.msra.mxu0 %v922
        %1250 = vmatpush.bf16.msra.mxu0 %v920
        %1251 = vmatpush.bf16.msra.mxu0 %v918
        %1252 = vmatpush.bf16.msra.mxu0 %v916
        %1253 = vmatpush.bf16.msra.mxu0 %v914
        %1254 = vmatpush.bf16.msra.mxu0 %v912
        %1255 = vmatmul.bf16.gmra.mxu0 %v499
        %v1256 = vpop.f32.mrf.mxu0
        %v1257 = vadd.f32 %v614, %v1256
        %v1258 = vpop.f32.mrf.mxu0
        %v1259 = vadd.f32 %v614, %v1258
        %1260 = vmatmul.bf16.gmra.mxu0 %v506
        %v1261 = vpop.f32.mrf.mxu0
        %v1262 = vadd.f32 %v614, %v1261
        %v1263 = vpop.f32.mrf.mxu0
        %v1264 = vadd.f32 %v614, %v1263
        %1265 = vdwg.mxu0
        %1266 = vmatpush.bf16.msra.mxu0 %v942
        %1267 = vmatpush.bf16.msra.mxu0 %v940
        %1268 = vmatpush.bf16.msra.mxu0 %v938
        %1269 = vmatpush.bf16.msra.mxu0 %v936
        %1270 = vmatpush.bf16.msra.mxu0 %v934
        %1271 = vmatpush.bf16.msra.mxu0 %v932
        %1272 = vmatpush.bf16.msra.mxu0 %v930
        %1273 = vmatpush.bf16.msra.mxu0 %v928
        %1274 = vmatmul.bf16.gmra.mxu0 %v500
        %v1275 = vpop.f32.mrf.mxu0
        %v1276 = vadd.f32 %v1257, %v1275
        %v1277 = vpop.f32.mrf.mxu0
        %v1278 = vadd.f32 %v1259, %v1277
        %1279 = vmatmul.bf16.gmra.mxu0 %v507
        %v1280 = vpop.f32.mrf.mxu0
        %v1281 = vadd.f32 %v1262, %v1280
        %v1282 = vpop.f32.mrf.mxu0
        %v1283 = vadd.f32 %v1264, %v1282
        %1284 = vdwg.mxu0
        %1285 = vmatpush.bf16.msra.mxu0 %v958
        %1286 = vmatpush.bf16.msra.mxu0 %v956
        %1287 = vmatpush.bf16.msra.mxu0 %v954
        %1288 = vmatpush.bf16.msra.mxu0 %v952
        %1289 = vmatpush.bf16.msra.mxu0 %v950
        %1290 = vmatpush.bf16.msra.mxu0 %v948
        %1291 = vmatpush.bf16.msra.mxu0 %v946
        %1292 = vmatpush.bf16.msra.mxu0 %v944
        %1293 = vmatmul.bf16.gmra.mxu0 %v501
        %v1294 = vpop.f32.mrf.mxu0
        %v1295 = vadd.f32 %v1276, %v1294
        %v1296 = vpop.f32.mrf.mxu0
        %v1297 = vadd.f32 %v1278, %v1296
        %1298 = vmatmul.bf16.gmra.mxu0 %v508
        %v1299 = vpop.f32.mrf.mxu0
        %v1300 = vadd.f32 %v1281, %v1299
        %v1301 = vpop.f32.mrf.mxu0
        %v1302 = vadd.f32 %v1283, %v1301
        %1303 = vdwg.mxu0
        %1304 = vmatpush.bf16.msra.mxu0 %v974
        %1305 = vmatpush.bf16.msra.mxu0 %v972
        %1306 = vmatpush.bf16.msra.mxu0 %v970
        %1307 = vmatpush.bf16.msra.mxu0 %v968
        %1308 = vmatpush.bf16.msra.mxu0 %v966
        %1309 = vmatpush.bf16.msra.mxu0 %v964
        %1310 = vmatpush.bf16.msra.mxu0 %v962
        %1311 = vmatpush.bf16.msra.mxu0 %v960
        %1312 = vmatmul.bf16.gmra.mxu0 %v502
        %v1313 = vpop.f32.mrf.mxu0
        %v1314 = vadd.f32 %v1295, %v1313
        %v1315 = vpop.f32.mrf.mxu0
        %v1316 = vadd.f32 %v1297, %v1315
        %1317 = vmatmul.bf16.gmra.mxu0 %v509
        %v1318 = vpop.f32.mrf.mxu0
        %v1319 = vadd.f32 %v1300, %v1318
        %v1320 = vpop.f32.mrf.mxu0
        %v1321 = vadd.f32 %v1302, %v1320
        %1322 = vdwg.mxu0
        %1323 = vmatpush.bf16.msra.mxu0 %v990
        %1324 = vmatpush.bf16.msra.mxu0 %v988
        %1325 = vmatpush.bf16.msra.mxu0 %v986
        %1326 = vmatpush.bf16.msra.mxu0 %v984
        %1327 = vmatpush.bf16.msra.mxu0 %v982
        %1328 = vmatpush.bf16.msra.mxu0 %v980
        %1329 = vmatpush.bf16.msra.mxu0 %v978
        %1330 = vmatpush.bf16.msra.mxu0 %v976
        %1331 = vmatmul.bf16.gmra.mxu0 %v503
        %v1332 = vpop.f32.mrf.mxu0
        %v1333 = vadd.f32 %v1314, %v1332
        %v1334 = vpop.f32.mrf.mxu0
        %v1335 = vadd.f32 %v1316, %v1334
        %1336 = vmatmul.bf16.gmra.mxu0 %v510
        %v1337 = vpop.f32.mrf.mxu0
        %v1338 = vadd.f32 %v1319, %v1337
        %v1339 = vpop.f32.mrf.mxu0
        %v1340 = vadd.f32 %v1321, %v1339
        %1341 = vdwg.mxu0
        %1342 = vmatpush.bf16.msra.mxu0 %v1006
        %1343 = vmatpush.bf16.msra.mxu0 %v1004
        %1344 = vmatpush.bf16.msra.mxu0 %v1002
        %1345 = vmatpush.bf16.msra.mxu0 %v1000
        %1346 = vmatpush.bf16.msra.mxu0 %v998
        %1347 = vmatpush.bf16.msra.mxu0 %v996
        %1348 = vmatpush.bf16.msra.mxu0 %v994
        %1349 = vmatpush.bf16.msra.mxu0 %v992
        %1350 = vmatmul.bf16.gmra.mxu0 %v504
        %v1351 = vpop.f32.mrf.mxu0
        %v1352 = vadd.f32 %v1333, %v1351
        %v1353 = vpop.f32.mrf.mxu0
        %v1354 = vadd.f32 %v1335, %v1353
        %1355 = vmatmul.bf16.gmra.mxu0 %v511
        %v1356 = vpop.f32.mrf.mxu0
        %v1357 = vadd.f32 %v1338, %v1356
        %v1358 = vpop.f32.mrf.mxu0
        %v1359 = vadd.f32 %v1340, %v1358
        %1360 = vdwg.mxu0
        %1361 = vmatpush.bf16.msra.mxu0 0
        %1362 = vmatpush.bf16.msra.mxu0 0
        %1363 = vmatpush.bf16.msra.mxu0 0
        %1364 = vmatpush.bf16.msra.mxu0 0
        %1365 = vmatpush.bf16.msra.mxu0 0
        %1366 = vmatpush.bf16.msra.mxu0 0
        %1367 = vmatpush.bf16.msra.mxu0 0
        %1368 = vmatpush.bf16.msra.mxu0 %v1008
        %1369 = vmatmul.bf16.gmra.mxu0 %v1109
        %v1370 = vpop.f32.mrf.mxu0
        %v1371 = vadd.f32 %v1352, %v1370
        %v1372 = vpop.f32.mrf.mxu0
        %v1373 = vadd.f32 %v1354, %v1372
        %1374 = vmatmul.bf16.gmra.mxu0 %v1112
        %v1375 = vpop.f32.mrf.mxu0
        %v1376 = vadd.f32 %v1357, %v1375
        %v1377 = vpop.f32.mrf.mxu0
        %v1378 = vadd.f32 %v1359, %v1377
        %1379 = vdwg.mxu0
        %v1380 = vmax.f32 %v1238, 0.0
        %v1381 = vmax.f32 %v1371, 0.0
        %v1382 = vmax.f32 %v1240, 0.0
        %v1383 = vmax.f32 %v1373, 0.0
        %v1384 = vmax.f32 %v1243, 0.0
        %v1385 = vmax.f32 %v1376, 0.0
        %v1386 = vmax.f32 %v1245, 0.0
        %v1387 = vmax.f32 %v1378, 0.0
        %v1388 = vpack.c.bf16 %v1382, %v1380
        %v1389 = vpack.c.bf16 %v1383, %v1381
        %v1390 = vpack.c.bf16 %v1386, %v1384
        %v1391 = vpack.c.bf16 %v1387, %v1385
        %v1392 = vld [vmem:[%s3] sm:$0xf]
        %v1393 = vld [vmem:[%s3 + $0x4] sm:$0xf]
        %v1394 = vld [vmem:[%s3 + $0x8] sm:$0xf]
        %v1395 = vld [vmem:[%s3 + $0xc] sm:$0xf]
        %v1396 = vld [vmem:[%s3 + $0x10] sm:$0xf]
        %v1397 = vld [vmem:[%s3 + $0x14] sm:$0xf]
        %v1398 = vld [vmem:[%s3 + $0x18] sm:$0xf]
        %v1399 = vld [vmem:[%s3 + $0x1c] sm:$0xf]
        %v1400 = vld [vmem:[%s3 + $0x20] sm:$0xf]
        %v1401 = vld [vmem:[%s3 + $0x24] sm:$0xf]
        %v1402 = vld [vmem:[%s3 + $0x28] sm:$0xf]
        %v1403 = vld [vmem:[%s3 + $0x2c] sm:$0xf]
        %v1404 = vld [vmem:[%s3 + $0x30] sm:$0xf]
        %v1405 = vld [vmem:[%s3 + $0x34] sm:$0xf]
        %v1406 = vld [vmem:[%s3 + $0x38] sm:$0xf]
        %v1407 = vld [vmem:[%s3 + $0x3c] sm:$0xf]
        %v1408 = vld [vmem:[%s3 + $0x40] sm:$0xf]
        %v1409 = vld [vmem:[%s3 + $0x44] sm:$0xf]
        %v1410 = vld [vmem:[%s3 + $0x48] sm:$0xf]
        %v1411 = vld [vmem:[%s3 + $0x4c] sm:$0xf]
        %v1412 = vld [vmem:[%s3 + $0x50] sm:$0xf]
        %v1413 = vld [vmem:[%s3 + $0x54] sm:$0xf]
        %v1414 = vld [vmem:[%s3 + $0x58] sm:$0xf]
        %v1415 = vld [vmem:[%s3 + $0x5c] sm:$0xf]
        %v1416 = vld [vmem:[%s3 + $0x60] sm:$0xf]
        %v1417 = vld [vmem:[%s3 + $0x64] sm:$0xf]
        %v1418 = vld [vmem:[%s3 + $0x68] sm:$0xf]
        %v1419 = vld [vmem:[%s3 + $0x6c] sm:$0xf]
        %v1420 = vld [vmem:[%s3 + $0x70] sm:$0xf]
        %v1421 = vld [vmem:[%s3 + $0x74] sm:$0xf]
        %v1422 = vld [vmem:[%s3 + $0x78] sm:$0xf]
        %v1423 = vld [vmem:[%s3 + $0x7c] sm:$0xf]
        %v1424 = vld [vmem:[%s4] sm:$0x1]
        %v1426 = vperm.slane %v1424, 0
        %v1460 = vunpack.c.l.b16 %v1392
        %v1461 = vunpack.c.l.b16 %v1393
        %v1462 = vunpack.c.l.b16 %v1394
        %v1463 = vunpack.c.l.b16 %v1395
        %v1464 = vunpack.c.l.b16 %v1396
        %v1465 = vunpack.c.l.b16 %v1397
        %v1466 = vunpack.c.l.b16 %v1398
        %v1467 = vunpack.c.l.b16 %v1399
        %v1468 = vunpack.c.l.b16 %v1400
        %v1469 = vunpack.c.l.b16 %v1401
        %v1470 = vunpack.c.l.b16 %v1402
        %v1471 = vunpack.c.l.b16 %v1403
        %v1472 = vunpack.c.l.b16 %v1404
        %v1473 = vunpack.c.l.b16 %v1405
        %v1474 = vunpack.c.l.b16 %v1406
        %v1475 = vunpack.c.l.b16 %v1407
        %v1476 = vunpack.c.l.b16 %v1408
        %v1477 = vunpack.c.l.b16 %v1409
        %v1478 = vunpack.c.l.b16 %v1410
        %v1479 = vunpack.c.l.b16 %v1411
        %v1480 = vunpack.c.l.b16 %v1412
        %v1481 = vunpack.c.l.b16 %v1413
        %v1482 = vunpack.c.l.b16 %v1414
        %v1483 = vunpack.c.l.b16 %v1415
        %v1484 = vunpack.c.l.b16 %v1416
        %v1485 = vunpack.c.l.b16 %v1417
        %v1486 = vunpack.c.l.b16 %v1418
        %v1487 = vunpack.c.l.b16 %v1419
        %v1488 = vunpack.c.l.b16 %v1420
        %v1489 = vunpack.c.l.b16 %v1421
        %v1490 = vunpack.c.l.b16 %v1422
        %v1491 = vunpack.c.l.b16 %v1423
        %v1492 = vpack.c.b16 %v1461, %v1460
        %v1493 = vpack.c.b16 %v1463, %v1462
        %v1494 = vpack.c.b16 %v1465, %v1464
        %v1495 = vpack.c.b16 %v1467, %v1466
        %v1496 = vpack.c.b16 %v1469, %v1468
        %v1497 = vpack.c.b16 %v1471, %v1470
        %v1498 = vpack.c.b16 %v1473, %v1472
        %v1499 = vpack.c.b16 %v1475, %v1474
        %v1500 = vpack.c.b16 %v1477, %v1476
        %v1501 = vpack.c.b16 %v1479, %v1478
        %v1502 = vpack.c.b16 %v1481, %v1480
        %v1503 = vpack.c.b16 %v1483, %v1482
        %v1504 = vpack.c.b16 %v1485, %v1484
        %v1505 = vpack.c.b16 %v1487, %v1486
        %v1506 = vpack.c.b16 %v1489, %v1488
        %v1507 = vpack.c.b16 %v1491, %v1490
        %1524 = vmatpush.bf16.msra.mxu0 %v1499
        %1525 = vmatpush.bf16.msra.mxu0 %v1498
        %1526 = vmatpush.bf16.msra.mxu0 %v1497
        %1527 = vmatpush.bf16.msra.mxu0 %v1496
        %1528 = vmatpush.bf16.msra.mxu0 %v1495
        %1529 = vmatpush.bf16.msra.mxu0 %v1494
        %1530 = vmatpush.bf16.msra.mxu0 %v1493
        %1531 = vmatpush.bf16.msra.mxu0 %v1492
        %1532 = vmatmul.bf16.gmra.mxu0 %v1388
        %v1533 = vpop.f32.mrf.mxu0
        %v1534 = vadd.f32 %v1426, %v1533
        %v1535 = vpop.f32.mrf.mxu0
        %v1536 = vadd.f32 %v1426, %v1535
        %1537 = vmatmul.bf16.gmra.mxu0 %v1390
        %v1538 = vpop.f32.mrf.mxu0
        %v1539 = vadd.f32 %v1426, %v1538
        %v1540 = vpop.f32.mrf.mxu0
        %v1541 = vadd.f32 %v1426, %v1540
        %1542 = vdwg.mxu0
        %1543 = vmatpush.bf16.msra.mxu0 %v1507
        %1544 = vmatpush.bf16.msra.mxu0 %v1506
        %1545 = vmatpush.bf16.msra.mxu0 %v1505
        %1546 = vmatpush.bf16.msra.mxu0 %v1504
        %1547 = vmatpush.bf16.msra.mxu0 %v1503
        %1548 = vmatpush.bf16.msra.mxu0 %v1502
        %1549 = vmatpush.bf16.msra.mxu0 %v1501
        %1550 = vmatpush.bf16.msra.mxu0 %v1500
        %1551 = vmatmul.bf16.gmra.mxu0 %v1389
        %v1552 = vpop.f32.mrf.mxu0
        %v1553 = vadd.f32 %v1534, %v1552
        %v1554 = vpop.f32.mrf.mxu0
        %v1555 = vadd.f32 %v1536, %v1554
        %1556 = vmatmul.bf16.gmra.mxu0 %v1391
        %v1557 = vpop.f32.mrf.mxu0
        %v1558 = vadd.f32 %v1539, %v1557
        %v1559 = vpop.f32.mrf.mxu0
        %v1560 = vadd.f32 %v1541, %v1559
        %1561 = vdwg.mxu0
        %v1562 = vmax.f32 %v1553, 0.0
        %v1563 = vmax.f32 %v1555, 0.0
        %v1564 = vmax.f32 %v1558, 0.0
        %v1565 = vmax.f32 %v1560, 0.0
        %v1566 = vpack.c.bf16 %v1563, %v1562
        %v1567 = vpack.c.bf16 %v1565, %v1564
        %v1568 = vld [vmem:[%s5] sm:$0xf]
        %v1569 = vld [vmem:[%s5 + $0x4] sm:$0xf]
        %v1570 = vld [vmem:[%s5 + $0x8] sm:$0xf]
        %v1571 = vld [vmem:[%s5 + $0xc] sm:$0xf]
        %v1572 = vld [vmem:[%s5 + $0x10] sm:$0xf]
        %v1573 = vld [vmem:[%s5 + $0x14] sm:$0xf]
        %v1574 = vld [vmem:[%s5 + $0x18] sm:$0xf]
        %v1575 = vld [vmem:[%s5 + $0x1c] sm:$0xf]
        %v1576 = vld [vmem:[%s5 + $0x20] sm:$0xf]
        %v1577 = vld [vmem:[%s5 + $0x24] sm:$0xf]
        %v1578 = vld [vmem:[%s5 + $0x28] sm:$0xf]
        %v1579 = vld [vmem:[%s5 + $0x2c] sm:$0xf]
        %v1580 = vld [vmem:[%s5 + $0x30] sm:$0xf]
        %v1581 = vld [vmem:[%s5 + $0x34] sm:$0xf]
        %v1582 = vld [vmem:[%s5 + $0x38] sm:$0xf]
        %v1583 = vld [vmem:[%s5 + $0x3c] sm:$0xf]
        %v1584 = vld [vmem:[%s6] sm:$0x1]
        %v1586 = vperm.slane %v1584, 0
        %v1604 = vunpack.c.l.b16 %v1568
        %v1605 = vunpack.c.l.b16 %v1569
        %v1606 = vunpack.c.l.b16 %v1570
        %v1607 = vunpack.c.l.b16 %v1571
        %v1608 = vunpack.c.l.b16 %v1572
        %v1609 = vunpack.c.l.b16 %v1573
        %v1610 = vunpack.c.l.b16 %v1574
        %v1611 = vunpack.c.l.b16 %v1575
        %v1612 = vunpack.c.l.b16 %v1576
        %v1613 = vunpack.c.l.b16 %v1577
        %v1614 = vunpack.c.l.b16 %v1578
        %v1615 = vunpack.c.l.b16 %v1579
        %v1616 = vunpack.c.l.b16 %v1580
        %v1617 = vunpack.c.l.b16 %v1581
        %v1618 = vunpack.c.l.b16 %v1582
        %v1619 = vunpack.c.l.b16 %v1583
        %v1620 = vpack.c.b16 %v1605, %v1604
        %v1621 = vpack.c.b16 %v1607, %v1606
        %v1622 = vpack.c.b16 %v1609, %v1608
        %v1623 = vpack.c.b16 %v1611, %v1610
        %v1624 = vpack.c.b16 %v1613, %v1612
        %v1625 = vpack.c.b16 %v1615, %v1614
        %v1626 = vpack.c.b16 %v1617, %v1616
        %v1627 = vpack.c.b16 %v1619, %v1618
        %1636 = vmatpush.bf16.msra.mxu0 %v1627
        %1637 = vmatpush.bf16.msra.mxu0 %v1626
        %1638 = vmatpush.bf16.msra.mxu0 %v1625
        %1639 = vmatpush.bf16.msra.mxu0 %v1624
        %1640 = vmatpush.bf16.msra.mxu0 %v1623
        %1641 = vmatpush.bf16.msra.mxu0 %v1622
        %1642 = vmatpush.bf16.msra.mxu0 %v1621
        %1643 = vmatpush.bf16.msra.mxu0 %v1620
        %1644 = vmatmul.bf16.gmra.mxu0 %v1566
        %v1645 = vpop.f32.mrf.mxu0
        %v1646 = vadd.f32 %v1586, %v1645
        %v1647 = vpop.f32.mrf.mxu0
        %v1648 = vadd.f32 %v1586, %v1647
        %1649 = vmatmul.bf16.gmra.mxu0 %v1567
        %v1650 = vpop.f32.mrf.mxu0
        %v1651 = vadd.f32 %v1586, %v1650
        %v1652 = vpop.f32.mrf.mxu0
        %v1653 = vadd.f32 %v1586, %v1652
        %1654 = vdwg.mxu0
        %v1655 = vmax.f32 %v1646, 0.0
        %v1656 = vmax.f32 %v1648, 0.0
        %v1657 = vmax.f32 %v1651, 0.0
        %v1658 = vmax.f32 %v1653, 0.0
        %v1659 = vpack.c.bf16 %v1656, %v1655
        %v1660 = vpack.c.bf16 %v1658, %v1657
        %v1661 = vld [vmem:[%s7] sm:$0xf]
        %v1662 = vld [vmem:[%s7 + $0x4] sm:$0xf]
        %v1663 = vld [vmem:[%s7 + $0x8] sm:$0xf]
        %v1664 = vld [vmem:[%s7 + $0xc] sm:$0xf]
        %v1665 = vld [vmem:[%s7 + $0x10] sm:$0xf]
        %v1666 = vld [vmem:[%s7 + $0x14] sm:$0xf]
        %v1667 = vld [vmem:[%s7 + $0x18] sm:$0xf]
        %v1668 = vld [vmem:[%s7 + $0x1c] sm:$0xf]
        %v1669 = vld [vmem:[%s7 + $0x20] sm:$0xf]
        %v1670 = vld [vmem:[%s7 + $0x24] sm:$0xf]
        %v1671 = vld [vmem:[%s7 + $0x28] sm:$0xf]
        %v1672 = vld [vmem:[%s7 + $0x2c] sm:$0xf]
        %v1673 = vld [vmem:[%s7 + $0x30] sm:$0xf]
        %v1674 = vld [vmem:[%s7 + $0x34] sm:$0xf]
        %v1675 = vld [vmem:[%s7 + $0x38] sm:$0xf]
        %v1676 = vld [vmem:[%s7 + $0x3c] sm:$0xf]
        %v1677 = vld [vmem:[%s8] sm:$0x1]
        %v1679 = vperm.slane %v1677, 0
        %v1697 = vunpack.c.l.b16 %v1661
        %v1698 = vunpack.c.l.b16 %v1662
        %v1699 = vunpack.c.l.b16 %v1663
        %v1700 = vunpack.c.l.b16 %v1664
        %v1701 = vunpack.c.l.b16 %v1665
        %v1702 = vunpack.c.l.b16 %v1666
        %v1703 = vunpack.c.l.b16 %v1667
        %v1704 = vunpack.c.l.b16 %v1668
        %v1705 = vunpack.c.l.b16 %v1669
        %v1706 = vunpack.c.l.b16 %v1670
        %v1707 = vunpack.c.l.b16 %v1671
        %v1708 = vunpack.c.l.b16 %v1672
        %v1709 = vunpack.c.l.b16 %v1673
        %v1710 = vunpack.c.l.b16 %v1674
        %v1711 = vunpack.c.l.b16 %v1675
        %v1712 = vunpack.c.l.b16 %v1676
        %v1713 = vpack.c.b16 %v1698, %v1697
        %v1714 = vpack.c.b16 %v1700, %v1699
        %v1715 = vpack.c.b16 %v1702, %v1701
        %v1716 = vpack.c.b16 %v1704, %v1703
        %v1717 = vpack.c.b16 %v1706, %v1705
        %v1718 = vpack.c.b16 %v1708, %v1707
        %v1719 = vpack.c.b16 %v1710, %v1709
        %v1720 = vpack.c.b16 %v1712, %v1711
        %1729 = vmatpush.bf16.msra.mxu0 %v1720
        %1730 = vmatpush.bf16.msra.mxu0 %v1719
        %1731 = vmatpush.bf16.msra.mxu0 %v1718
        %1732 = vmatpush.bf16.msra.mxu0 %v1717
        %1733 = vmatpush.bf16.msra.mxu0 %v1716
        %1734 = vmatpush.bf16.msra.mxu0 %v1715
        %1735 = vmatpush.bf16.msra.mxu0 %v1714
        %1736 = vmatpush.bf16.msra.mxu0 %v1713
        %1737 = vmatmul.bf16.gmra.mxu0 %v1659
        %v1738 = vpop.f32.mrf.mxu0
        %v1739 = vadd.f32 %v1679, %v1738
        %v1740 = vpop.f32.mrf.mxu0
        %v1741 = vadd.f32 %v1679, %v1740
        %1742 = vmatmul.bf16.gmra.mxu0 %v1660
        %v1743 = vpop.f32.mrf.mxu0
        %v1744 = vadd.f32 %v1679, %v1743
        %v1745 = vpop.f32.mrf.mxu0
        %v1746 = vadd.f32 %v1679, %v1745
        %1747 = vdwg.mxu0
        %v1748 = vmax.f32 %v1739, 0.0
        %v1749 = vmax.f32 %v1741, 0.0
        %v1750 = vmax.f32 %v1744, 0.0
        %v1751 = vmax.f32 %v1746, 0.0
        %v1752 = vpack.c.bf16 %v1749, %v1748
        %v1753 = vpack.c.bf16 %v1751, %v1750
        %v1754 = vld [vmem:[%s9] sm:$0xf]
        %v1755 = vld [vmem:[%s9 + $0x4] sm:$0xf]
        %v1756 = vld [vmem:[%s9 + $0x8] sm:$0xf]
        %v1757 = vld [vmem:[%s9 + $0xc] sm:$0xf]
        %v1758 = vld [vmem:[%s9 + $0x10] sm:$0xf]
        %v1759 = vld [vmem:[%s9 + $0x14] sm:$0xf]
        %v1760 = vld [vmem:[%s9 + $0x18] sm:$0xf]
        %v1761 = vld [vmem:[%s9 + $0x1c] sm:$0xf]
        %v1762 = vld [vmem:[%s9 + $0x20] sm:$0xf]
        %v1763 = vld [vmem:[%s9 + $0x24] sm:$0xf]
        %v1764 = vld [vmem:[%s9 + $0x28] sm:$0xf]
        %v1765 = vld [vmem:[%s9 + $0x2c] sm:$0xf]
        %v1766 = vld [vmem:[%s9 + $0x30] sm:$0xf]
        %v1767 = vld [vmem:[%s9 + $0x34] sm:$0xf]
        %v1768 = vld [vmem:[%s9 + $0x38] sm:$0xf]
        %v1769 = vld [vmem:[%s9 + $0x3c] sm:$0xf]
        %v1770 = vld [vmem:[%s10] sm:$0x1]
        %v1772 = vperm.slane %v1770, 0
        %v1790 = vunpack.c.l.b16 %v1754
        %v1791 = vunpack.c.l.b16 %v1755
        %v1792 = vunpack.c.l.b16 %v1756
        %v1793 = vunpack.c.l.b16 %v1757
        %v1794 = vunpack.c.l.b16 %v1758
        %v1795 = vunpack.c.l.b16 %v1759
        %v1796 = vunpack.c.l.b16 %v1760
        %v1797 = vunpack.c.l.b16 %v1761
        %v1798 = vunpack.c.l.b16 %v1762
        %v1799 = vunpack.c.l.b16 %v1763
        %v1800 = vunpack.c.l.b16 %v1764
        %v1801 = vunpack.c.l.b16 %v1765
        %v1802 = vunpack.c.l.b16 %v1766
        %v1803 = vunpack.c.l.b16 %v1767
        %v1804 = vunpack.c.l.b16 %v1768
        %v1805 = vunpack.c.l.b16 %v1769
        %v1806 = vpack.c.b16 %v1791, %v1790
        %v1807 = vpack.c.b16 %v1793, %v1792
        %v1808 = vpack.c.b16 %v1795, %v1794
        %v1809 = vpack.c.b16 %v1797, %v1796
        %v1810 = vpack.c.b16 %v1799, %v1798
        %v1811 = vpack.c.b16 %v1801, %v1800
        %v1812 = vpack.c.b16 %v1803, %v1802
        %v1813 = vpack.c.b16 %v1805, %v1804
        %1822 = vmatpush.bf16.msra.mxu0 %v1813
        %1823 = vmatpush.bf16.msra.mxu0 %v1812
        %1824 = vmatpush.bf16.msra.mxu0 %v1811
        %1825 = vmatpush.bf16.msra.mxu0 %v1810
        %1826 = vmatpush.bf16.msra.mxu0 %v1809
        %1827 = vmatpush.bf16.msra.mxu0 %v1808
        %1828 = vmatpush.bf16.msra.mxu0 %v1807
        %1829 = vmatpush.bf16.msra.mxu0 %v1806
        %1830 = vmatmul.bf16.gmra.mxu0 %v1752
        %v1831 = vpop.f32.mrf.mxu0
        %v1832 = vadd.f32 %v1772, %v1831
        %v1833 = vpop.f32.mrf.mxu0
        %v1834 = vadd.f32 %v1772, %v1833
        %1835 = vmatmul.bf16.gmra.mxu0 %v1753
        %v1836 = vpop.f32.mrf.mxu0
        %v1837 = vadd.f32 %v1772, %v1836
        %v1838 = vpop.f32.mrf.mxu0
        %v1839 = vadd.f32 %v1772, %v1838
        %1840 = vdwg.mxu0
        %v1841 = vmax.f32 %v1832, 0.0
        %v1842 = vmax.f32 %v1834, 0.0
        %v1843 = vmax.f32 %v1837, 0.0
        %v1844 = vmax.f32 %v1839, 0.0
        %v1845 = vpack.c.bf16 %v1842, %v1841
        %v1846 = vpack.c.bf16 %v1844, %v1843
        %v1847 = vld [vmem:[%s11] sm:$0xf]
        %v1848 = vld [vmem:[%s11 + $0x4] sm:$0xf]
        %v1849 = vld [vmem:[%s11 + $0x8] sm:$0xf]
        %v1850 = vld [vmem:[%s11 + $0xc] sm:$0xf]
        %v1851 = vld [vmem:[%s11 + $0x10] sm:$0xf]
        %v1852 = vld [vmem:[%s11 + $0x14] sm:$0xf]
        %v1853 = vld [vmem:[%s11 + $0x18] sm:$0xf]
        %v1854 = vld [vmem:[%s11 + $0x1c] sm:$0xf]
        %v1855 = vld [vmem:[%s11 + $0x20] sm:$0xf]
        %v1856 = vld [vmem:[%s11 + $0x24] sm:$0xf]
        %v1857 = vld [vmem:[%s11 + $0x28] sm:$0xf]
        %v1858 = vld [vmem:[%s11 + $0x2c] sm:$0xf]
        %v1859 = vld [vmem:[%s11 + $0x30] sm:$0xf]
        %v1860 = vld [vmem:[%s11 + $0x34] sm:$0xf]
        %v1861 = vld [vmem:[%s11 + $0x38] sm:$0xf]
        %v1862 = vld [vmem:[%s11 + $0x3c] sm:$0xf]
        %v1863 = vld [vmem:[%s12] sm:$0x1]
        %v1865 = vperm.slane %v1863, 0
        %v1883 = vunpack.c.l.b16 %v1847
        %v1884 = vunpack.c.l.b16 %v1848
        %v1885 = vunpack.c.l.b16 %v1849
        %v1886 = vunpack.c.l.b16 %v1850
        %v1887 = vunpack.c.l.b16 %v1851
        %v1888 = vunpack.c.l.b16 %v1852
        %v1889 = vunpack.c.l.b16 %v1853
        %v1890 = vunpack.c.l.b16 %v1854
        %v1891 = vunpack.c.l.b16 %v1855
        %v1892 = vunpack.c.l.b16 %v1856
        %v1893 = vunpack.c.l.b16 %v1857
        %v1894 = vunpack.c.l.b16 %v1858
        %v1895 = vunpack.c.l.b16 %v1859
        %v1896 = vunpack.c.l.b16 %v1860
        %v1897 = vunpack.c.l.b16 %v1861
        %v1898 = vunpack.c.l.b16 %v1862
        %v1899 = vpack.c.b16 %v1884, %v1883
        %v1900 = vpack.c.b16 %v1886, %v1885
        %v1901 = vpack.c.b16 %v1888, %v1887
        %v1902 = vpack.c.b16 %v1890, %v1889
        %v1903 = vpack.c.b16 %v1892, %v1891
        %v1904 = vpack.c.b16 %v1894, %v1893
        %v1905 = vpack.c.b16 %v1896, %v1895
        %v1906 = vpack.c.b16 %v1898, %v1897
        %1915 = vmatpush.bf16.msra.mxu0 %v1906
        %1916 = vmatpush.bf16.msra.mxu0 %v1905
        %1917 = vmatpush.bf16.msra.mxu0 %v1904
        %1918 = vmatpush.bf16.msra.mxu0 %v1903
        %1919 = vmatpush.bf16.msra.mxu0 %v1902
        %1920 = vmatpush.bf16.msra.mxu0 %v1901
        %1921 = vmatpush.bf16.msra.mxu0 %v1900
        %1922 = vmatpush.bf16.msra.mxu0 %v1899
        %1923 = vmatmul.bf16.gmra.mxu0 %v1845
        %v1924 = vpop.f32.mrf.mxu0
        %v1925 = vadd.f32 %v1865, %v1924
        %v1926 = vpop.f32.mrf.mxu0
        %v1927 = vadd.f32 %v1865, %v1926
        %1928 = vmatmul.bf16.gmra.mxu0 %v1846
        %v1929 = vpop.f32.mrf.mxu0
        %v1930 = vadd.f32 %v1865, %v1929
        %v1931 = vpop.f32.mrf.mxu0
        %v1932 = vadd.f32 %v1865, %v1931
        %1933 = vdwg.mxu0
        %1934 = vst [vmem:[%s447] sm:$0xff] %v1925
        %1935 = vst [vmem:[%s447 + $0x8] sm:$0xff] %v1927
        %1936 = vst [vmem:[%s447 + $0x10] sm:$0xff] %v1930
        %1937 = vst [vmem:[%s447 + $0x18] sm:$0xff] %v1932
        %s1938 = sand.u32 %s310, 1
        %s1939 = sand.u32 %s310, 1
        %s1940 = smul.addr %s1939, 32
        %s1941 = scalar_lea.vmem [#allocation2], %s1940
        // Predicated region
        $region73: #{mlp_forward.1} parent=71 // pred_check
          %p1942 = pneg %p320
        $region74: #{mlp_forward.1} parent=71 // pred_check_branch
          %1944 = sbr.rel (%p1942) target = $region76
        $region75: #{mlp_forward.1} parent=71 // pred_region
          %s1945 = smul.u32 4, %s24
          %s1946 = ssub.s32 5, %s1945
          %p1947 = scmp.lt.s32.totalorder %s1946, 4
          %s1948 = scalar_select %p1947, %s1946, 4
          %s1949 = smul.u32 8, %s1948
          %p1950 = scmp.ne.s32.totalorder 0, %s1949
          %s1951 = smul.addr %s1945, 8
          %s1952 = scalar_lea.vmem %s13, %s1951
          // Predicated region
          $region77: #{mlp_forward.1} parent=75 // pred_check
            %p1953 = pneg %p1950
          $region78: #{mlp_forward.1} parent=75 // pred_check_branch
            %1955 = sbr.rel (%p1953) target = $region80
          $region79: #{mlp_forward.1} parent=75 // pred_region
            // Predicated region
            $region81: #{mlp_forward.1} parent=79 // pred_check
              _
            $region82: #{mlp_forward.1} parent=79 // pred_check_branch
              %1957 = sbr.rel (0) target = $region84
            $region83: #{mlp_forward.1} parent=79 // pred_region
              // Predicated region
              $region103: #{mlp_forward.1} parent=83 // pred_check
                _
              $region104: #{mlp_forward.1} parent=83 // pred_check_branch
                %2013 = sbr.rel (0) target = $region106
              $region105: #{mlp_forward.1} parent=83 // pred_region
                %s2014 = sshrl.u32 %s1948, 2
                // While loop
                $region107: #{mlp_forward.1} parent=105 // loop_pre_header
                  _
                $region108: #{mlp_forward.1} parent=105 // loop_header
                  %s2016 = sphi 0, %s2018
                  %p2017 = scmp.ge.s32.totalorder %s2016, %s2014
                  %s2021 = sphi 0, %s2034
                  %s2022 = sphi %s1941, %s2037
                  %s2023 = sphi %s1952, %s2038
                $region109: #{mlp_forward.1} parent=105 // loop_header_branch
                  %2020 = sbr.rel (%p2017) target = $region113
                $region110: #{mlp_forward.1} parent=105 // loop_body
                  %v2024 = vld [vmem:[%s2022] sm:$0xff]
                  %2025 = vst [vmem:[%s2023] sm:$0xff] %v2024
                  %v2026 = vld [vmem:[%s2022 + $0x8] sm:$0xff]
                  %2027 = vst [vmem:[%s2023 + $0x8] sm:$0xff] %v2026
                  %v2028 = vld [vmem:[%s2022 + $0x10] sm:$0xff]
                  %2029 = vst [vmem:[%s2023 + $0x10] sm:$0xff] %v2028
                  %v2030 = vld [vmem:[%s2022 + $0x18] sm:$0xff]
                  %2031 = vst [vmem:[%s2023 + $0x18] sm:$0xff] %v2030
                  %s2032 = sadd.s32 1, %s2021
                  %p2033 = scmp.ge.s32.totalorder %s2032, %s2014
                  %s2034 = scalar_select %p2033, 0, %s2032
                  %s2035 = smul.u32 %s2034, 32
                  %s2036 = smul.u32 %s2034, 32
                  %s2037 = scalar_lea.vmem %s1941, %s2035 [#allocation2]
                  %s2038 = scalar_lea.vmem %s1952, %s2036
                $region111: #{mlp_forward.1} parent=105 // loop_footer
                  %s2018 = sadd.s32 %s2016, 1
                $region112: #{mlp_forward.1} parent=105 // loop_footer_branch
                  %2015 = sbr.rel target = $region108
                $region113: #{mlp_forward.1} parent=105 // loop_exit
                  _
                %s2039 = sshrl.u32 %s1948, 2
                %s2040 = sand.u32 %s1948, 3
                %s2041 = smul.u32 %s2039, 4
                %s2042 = smul.u32 8, %s2041
                %s2043 = scalar_lea.vmem %s1941, %s2042 [#allocation2]
                %s2044 = smul.u32 8, %s2041
                %s2045 = scalar_lea.vmem %s1952, %s2044
                // While loop
                $region114: #{mlp_forward.1} parent=105 // loop_pre_header
                  _
                $region115: #{mlp_forward.1} parent=105 // loop_header
                  %s2047 = sphi 0, %s2049
                  %p2048 = scmp.ge.s32.totalorder %s2047, %s2040
                  %s2052 = sphi 0, %s2059
                  %s2053 = sphi %s2043, %s2062
                  %s2054 = sphi %s2045, %s2063
                $region116: #{mlp_forward.1} parent=105 // loop_header_branch
                  %2051 = sbr.rel (%p2048) target = $region120
                $region117: #{mlp_forward.1} parent=105 // loop_body
                  %v2055 = vld [vmem:[%s2053] sm:$0xff]
                  %2056 = vst [vmem:[%s2054] sm:$0xff] %v2055
                  %s2057 = sadd.s32 1, %s2052
                  %p2058 = scmp.ge.s32.totalorder %s2057, %s2040
                  %s2059 = scalar_select %p2058, 0, %s2057
                  %s2060 = smul.u32 %s2059, 8
                  %s2061 = smul.u32 %s2059, 8
                  %s2062 = scalar_lea.vmem %s2043, %s2060 [#allocation2]
                  %s2063 = scalar_lea.vmem %s2045, %s2061
                $region118: #{mlp_forward.1} parent=105 // loop_footer
                  %s2049 = sadd.s32 %s2047, 1
                $region119: #{mlp_forward.1} parent=105 // loop_footer_branch
                  %2046 = sbr.rel target = $region115
                $region120: #{mlp_forward.1} parent=105 // loop_exit
                  _
              $region106: #{mlp_forward.1} parent=83 // pred_fallthru
                _
              // Predicated region
              $region121: #{mlp_forward.1} parent=83 // pred_check
                _
              $region122: #{mlp_forward.1} parent=83 // pred_check_branch
                %2065 = sbr.rel target = $region124
              $region123: #{mlp_forward.1} parent=83 // pred_region
                _
              $region124: #{mlp_forward.1} parent=83 // pred_fallthru
                _
            $region84: #{mlp_forward.1} parent=79 // pred_fallthru
              _
            // Predicated region
            $region85: #{mlp_forward.1} parent=79 // pred_check
              _
            $region86: #{mlp_forward.1} parent=79 // pred_check_branch
              %1959 = sbr.rel target = $region88
            $region87: #{mlp_forward.1} parent=79 // pred_region
              %s1961 = ssub.s32 256, 1
              %s1962 = sshrl.u32 %s1948, 2
              // While loop
              $region89: #{mlp_forward.1} parent=87 // loop_pre_header
                _
              $region90: #{mlp_forward.1} parent=87 // loop_header
                %s1964 = sphi 0, %s1966
                %p1965 = scmp.ge.s32.totalorder %s1964, %s1962
                %s1969 = sphi 0, %s1982
                %s1970 = sphi %s1941, %s1985
                %s1971 = sphi %s1952, %s1986
              $region91: #{mlp_forward.1} parent=87 // loop_header_branch
                %1968 = sbr.rel (%p1965) target = $region95
              $region92: #{mlp_forward.1} parent=87 // loop_body
                %v1972 = vld [vmem:[%s1970] sm:%s1961]
                %1973 = vst [vmem:[%s1971] sm:%s1961] %v1972
                %v1974 = vld [vmem:[%s1970 + $0x8] sm:%s1961]
                %1975 = vst [vmem:[%s1971 + $0x8] sm:%s1961] %v1974
                %v1976 = vld [vmem:[%s1970 + $0x10] sm:%s1961]
                %1977 = vst [vmem:[%s1971 + $0x10] sm:%s1961] %v1976
                %v1978 = vld [vmem:[%s1970 + $0x18] sm:%s1961]
                %1979 = vst [vmem:[%s1971 + $0x18] sm:%s1961] %v1978
                %s1980 = sadd.s32 1, %s1969
                %p1981 = scmp.ge.s32.totalorder %s1980, %s1962
                %s1982 = scalar_select %p1981, 0, %s1980
                %s1983 = smul.u32 %s1982, 32
                %s1984 = smul.u32 %s1982, 32
                %s1985 = scalar_lea.vmem %s1941, %s1983 [#allocation2]
                %s1986 = scalar_lea.vmem %s1952, %s1984
              $region93: #{mlp_forward.1} parent=87 // loop_footer
                %s1966 = sadd.s32 %s1964, 1
              $region94: #{mlp_forward.1} parent=87 // loop_footer_branch
                %1963 = sbr.rel target = $region90
              $region95: #{mlp_forward.1} parent=87 // loop_exit
                _
              %s1987 = sshrl.u32 %s1948, 2
              %s1988 = sand.u32 %s1948, 3
              %s1989 = smul.u32 %s1987, 4
              %s1990 = smul.u32 8, %s1989
              %s1991 = scalar_lea.vmem %s1941, %s1990 [#allocation2]
              %s1992 = smul.u32 8, %s1989
              %s1993 = scalar_lea.vmem %s1952, %s1992
              // While loop
              $region96: #{mlp_forward.1} parent=87 // loop_pre_header
                _
              $region97: #{mlp_forward.1} parent=87 // loop_header
                %s1995 = sphi 0, %s1997
                %p1996 = scmp.ge.s32.totalorder %s1995, %s1988
                %s2000 = sphi 0, %s2007
                %s2001 = sphi %s1991, %s2010
                %s2002 = sphi %s1993, %s2011
              $region98: #{mlp_forward.1} parent=87 // loop_header_branch
                %1999 = sbr.rel (%p1996) target = $region102
              $region99: #{mlp_forward.1} parent=87 // loop_body
                %v2003 = vld [vmem:[%s2001] sm:%s1961]
                %2004 = vst [vmem:[%s2002] sm:%s1961] %v2003
                %s2005 = sadd.s32 1, %s2000
                %p2006 = scmp.ge.s32.totalorder %s2005, %s1988
                %s2007 = scalar_select %p2006, 0, %s2005
                %s2008 = smul.u32 %s2007, 8
                %s2009 = smul.u32 %s2007, 8
                %s2010 = scalar_lea.vmem %s1991, %s2008 [#allocation2]
                %s2011 = scalar_lea.vmem %s1993, %s2009
              $region100: #{mlp_forward.1} parent=87 // loop_footer
                %s1997 = sadd.s32 %s1995, 1
              $region101: #{mlp_forward.1} parent=87 // loop_footer_branch
                %1994 = sbr.rel target = $region97
              $region102: #{mlp_forward.1} parent=87 // loop_exit
                _
            $region88: #{mlp_forward.1} parent=79 // pred_fallthru
              _
          $region80: #{mlp_forward.1} parent=75 // pred_fallthru
            _
          %2066 = vnop
        $region76: #{mlp_forward.1} parent=71 // pred_fallthru
          _
      $region72: #{mlp_forward.1} parent=5 // pred_fallthru
        _
      %p2067 = scmp.le.s32.totalorder 2, %s19
      // Predicated region
      $region125: #{mlp_forward.1} parent=5 // pred_check
        %p2068 = pneg %p2067
      $region126: #{mlp_forward.1} parent=5 // pred_check_branch
        %2070 = sbr.rel (%p2068) target = $region128
      $region127: #{mlp_forward.1} parent=5 // pred_region
        %s2071 = ssub.s32 %s19, 2
        // Predicated region
        $region129: #{mlp_forward.1} parent=127 // pred_check
          %p2072 = pneg %p326
        $region130: #{mlp_forward.1} parent=127 // pred_check_branch
          %2074 = sbr.rel (%p2072) target = $region132
        $region131: #{mlp_forward.1} parent=127 // pred_region
          %s2075 = sand.u32 %s311, 1
          %s2076 = sand.u32 %s311, 1
          %s2077 = smul.addr %s2076, 32
          %s2078 = scalar_lea.vmem [#allocation2], %s2077
        $region132: #{mlp_forward.1} parent=127 // pred_fallthru
          _
      $region128: #{mlp_forward.1} parent=5 // pred_fallthru
        _
    $region6: #{mlp_forward.1} parent=1 // loop_footer
      %s23 = sadd.s32 1, %s19
    $region7: #{mlp_forward.1} parent=1 // loop_footer_branch
      %18 = sbr.rel target = $region3
    $region8: #{mlp_forward.1} parent=1 // loop_exit
      _

</llo_original>
